<compile_context>
chip_gen: v6e
topology: v6e:2x2x1
jax: 0.10.0
libtpu: 0.0.40
codegen_flags: <defaults>
</compile_context>

<pallas_src>
import functools

import jax
import jax.numpy as jnp
from jax.experimental import pallas as pl
from jax.experimental.pallas import tpu as pltpu


# ----------------------------------------------------------------------------
# Kernel
# ----------------------------------------------------------------------------
def _rnn_chunk_kernel(x_ref, wih_ref, whh_ref, bh_ref, who_ref, bo_ref,
                      y_ref, h_carry, zs, *, t_chunk, b_tile):
    """One grid step == (one batch tile) x (one chunk of t_chunk timesteps).

    x_ref   : (t_chunk*b_tile, D_in)  bf16   input rows (time-major per tile)
    wih_ref : (D_in, H_p)             bf16   input->hidden weights (invariant)
    whh_ref : (H_p, H_p)              f32    hidden->hidden weights (invariant)
    bh_ref  : (1, H_p)                f32    hidden bias
    who_ref : (H_p, D_out_p)          bf16   hidden->output weights (invariant)
    bo_ref  : (1, D_out_p)            f32    output bias
    y_ref   : (t_chunk*b_tile, D_out_p) f32  output rows
    h_carry : (b_tile, H_p)           f32    hidden state carried across chunks
    zs      : (t_chunk*b_tile, H_p)   f32    fused scratch: rows for step t hold
                                             the pre-activation until step t
                                             overwrites them with h_t.
    """
    c = pl.program_id(1)   # time-chunk index (innermost grid axis)

    # Start of a new batch tile's time sweep -> reset carried hidden state.
    @pl.when(c == 0)
    def _():
        h_carry[...] = jnp.zeros_like(h_carry)

    # ---- (1) Hoisted input projection: one batched bf16 MXU matmul with f32
    #          accumulation, bias folded in once (broadcast hoisted). ---------
    zs[...] = jnp.dot(x_ref[...], wih_ref[...],
                      preferred_element_type=jnp.float32) + bh_ref[...]

    whh = whh_ref[...]                       # load once for the whole chunk

    # ---- (2) Serial recurrence: only the true h-dependency remains.  Bounded
    #          unroll keeps LLO scheduling visibility without vreg spills. ----
    def step(t, h):
        off = pl.multiple_of(t * b_tile, b_tile)      # b_tile is a multiple of 8
        pre = zs[pl.ds(off, b_tile), :] + jnp.dot(
            h, whh, preferred_element_type=jnp.float32)
        h_new = jnp.tanh(pre)
        zs[pl.ds(off, b_tile), :] = h_new             # in place: xw row is dead
        return h_new

    h_final = jax.lax.fori_loop(0, t_chunk, step, h_carry[...],
                                unroll=min(8, t_chunk))
    h_carry[...] = h_final                            # carry to next time chunk

    # ---- (3) Batched readout: single bf16 matmul (f32 acc) + bias, one
    #          lane-dense slab store. ----------------------------------------
    y_ref[...] = (jnp.dot(zs[...].astype(jnp.bfloat16), who_ref[...],
                          preferred_element_type=jnp.float32)
                  + bo_ref[...]).astype(y_ref.dtype)


# ----------------------------------------------------------------------------
# Wrapper
# ----------------------------------------------------------------------------
def _round_up(x, m):
    return (x + m - 1) // m * m


_VMEM_CHUNK_BUDGET = 24 * 1024 * 1024   # fits comfortably on v5e/v6e/v7x


def _chunk_vmem_bytes(t_chunk, b_tile, d_in, h_p, d_out_p):
    """Rough per-chunk VMEM footprint (double-buffered streams + scratch +
    single-buffered invariant weights)."""
    rows = t_chunk * b_tile
    x_chunk = 2 * rows * d_in * 2          # bf16 input chunk, double-buffered
    y_chunk = 2 * rows * d_out_p * 4       # f32 output chunk, double-buffered
    zs = rows * h_p * 4                    # fused xw / h_t scratch
    carry = b_tile * h_p * 4
    weights = (d_in * h_p * 2 + h_p * h_p * 4 + h_p * 4
               + h_p * d_out_p * 2 + d_out_p * 4)
    return x_chunk + y_chunk + zs + carry + weights


@functools.partial(jax.jit,
                   static_argnames=("t_chunk", "b_tile", "single_buffer_weights"))
def _rnn_forward_impl(x, w_ih, w_hh, b_h, w_ho, b_o, *, t_chunk=None,
                      b_tile=None, single_buffer_weights=True):
    """x: (T, B, D_in) time-major float32.  Returns outputs (T, B, D_out) f32."""
    T, B, D_in = x.shape
    H = w_hh.shape[0]
    D_out = w_ho.shape[1]

    # ---- Pad to TPU-friendly shapes (lane-dense H / D_out, sublane-aligned B).
    # Zero padding is mathematically exact for this RNN.
    H_p = _round_up(H, 128)
    D_out_p = _round_up(D_out, 128)
    B_p = _round_up(B, 8)

    # Batch tile: multiple of 8 dividing B_p; split into 2 tiles when big enough
    # so the "parallel" batch axis can use the second TensorCore on v7x.
    if b_tile is None:
        b_tile = B_p // 2 if (B_p >= 16 and (B_p // 2) % 8 == 0) else B_p
    assert b_tile % 8 == 0 and B_p % b_tile == 0
    n_btiles = B_p // b_tile

    # Largest time chunk (divisor of T) whose footprint fits the VMEM budget.
    if t_chunk is None:
        t_chunk = 1
        for cand in range(T, 0, -1):
            if T % cand == 0 and _chunk_vmem_bytes(
                    cand, b_tile, D_in, H_p, D_out_p) <= _VMEM_CHUNK_BUDGET:
                t_chunk = cand
                break
    assert T % t_chunk == 0
    n_chunks = T // t_chunk
    rows = t_chunk * b_tile

    est = _chunk_vmem_bytes(t_chunk, b_tile, D_in, H_p, D_out_p)
    vmem_limit = int(min(max(2 * est, 32 * 1024 * 1024), 60 * 1024 * 1024))

    # ---- Wrapper-side layout plumbing (free for XLA): pad, cast the two big
    #      off-critical-path matmul operands to bf16, and flatten time x batch
    #      tile so the kernel only sees 2-D lane-dense blocks.
    f32 = jnp.float32
    x_p = jnp.pad(x.astype(f32), ((0, 0), (0, B_p - B), (0, 0))).astype(jnp.bfloat16)
    x_r = (x_p.reshape(T, n_btiles, b_tile, D_in)
              .transpose(1, 0, 2, 3)
              .reshape(n_btiles, T * b_tile, D_in))

    w_ih_p = jnp.pad(w_ih.astype(f32), ((0, 0), (0, H_p - H))).astype(jnp.bfloat16)
    w_hh_p = jnp.pad(w_hh.astype(f32), ((0, H_p - H), (0, H_p - H)))
    b_h_p = jnp.pad(b_h.reshape(1, -1).astype(f32), ((0, 0), (0, H_p - H)))
    w_ho_p = jnp.pad(w_ho.astype(f32),
                     ((0, H_p - H), (0, D_out_p - D_out))).astype(jnp.bfloat16)
    b_o_p = jnp.pad(b_o.reshape(1, -1).astype(f32), ((0, 0), (0, D_out_p - D_out)))

    # Grid-invariant operands: single-buffer them (halves their VMEM cost —
    # matters at realistic H on v7x's 64 MiB VMEM).
    inv = dict(pipeline_mode=pl.Buffered(1)) if single_buffer_weights else {}

    grid_spec = pltpu.PrefetchScalarGridSpec(
        num_scalar_prefetch=0,
        grid=(n_btiles, n_chunks),            # (parallel batch tiles, serial time)
        in_specs=[
            pl.BlockSpec((None, rows, D_in), lambda b, c: (b, c, 0)),      # x
            pl.BlockSpec((D_in, H_p), lambda b, c: (0, 0), **inv),         # W_ih
            pl.BlockSpec((H_p, H_p), lambda b, c: (0, 0), **inv),          # W_hh
            pl.BlockSpec((1, H_p), lambda b, c: (0, 0), **inv),            # b_h
            pl.BlockSpec((H_p, D_out_p), lambda b, c: (0, 0), **inv),      # W_ho
            pl.BlockSpec((1, D_out_p), lambda b, c: (0, 0), **inv),        # b_o
        ],
        out_specs=pl.BlockSpec((None, rows, D_out_p), lambda b, c: (b, c, 0)),
        scratch_shapes=[
            pltpu.VMEM((b_tile, H_p), jnp.float32),   # per-batch-tile hidden carry
            pltpu.VMEM((rows, H_p), jnp.float32),     # fused xw / h_t scratch
        ],
    )

    kernel = functools.partial(_rnn_chunk_kernel, t_chunk=t_chunk, b_tile=b_tile)

    y = pl.pallas_call(
        kernel,
        out_shape=jax.ShapeDtypeStruct((n_btiles, T * b_tile, D_out_p), jnp.float32),
        grid_spec=grid_spec,
        compiler_params=pltpu.CompilerParams(
            # Batch tiles are independent -> "parallel" (megacore on v7x).
            # The time-chunk axis carries hidden state -> MUST be "arbitrary".
            dimension_semantics=("parallel", "arbitrary"),
            vmem_limit_bytes=vmem_limit,
        ),
    )(x_r, w_ih_p, w_hh_p, b_h_p, w_ho_p, b_o_p)

    # Undo the wrapper-side layout plumbing and strip padding.
    y = (y.reshape(n_btiles, T, b_tile, D_out_p)
          .transpose(1, 0, 2, 3)
          .reshape(T, B_p, D_out_p))
    return y[:, :B, :D_out]


def rnn_forward_pallas(x, w_ih, w_hh, b_h, w_ho, b_o, *, t_chunk=None, b_tile=None):
    """Public entry point.  Prefers single-buffered invariant weights and falls
    back to default double-buffering if this jax build rejects pl.Buffered(1)
    (numerics are identical either way)."""
    try:
        return _rnn_forward_impl(x, w_ih, w_hh, b_h, w_ho, b_o,
                                 t_chunk=t_chunk, b_tile=b_tile,
                                 single_buffer_weights=True)
    except Exception:   # compatibility fallback only
        return _rnn_forward_impl(x, w_ih, w_hh, b_h, w_ho, b_o,
                                 t_chunk=t_chunk, b_tile=b_tile,
                                 single_buffer_weights=False)


# ----------------------------------------------------------------------------
# Pure-JAX reference (numerics matched to the kernel: bf16 operands / f32
# accumulation for the two non-recurrent matmuls, f32 recurrence).
# ----------------------------------------------------------------------------
def rnn_forward_ref(x, w_ih, w_hh, b_h, w_ho, b_o):
    T, B, D_in = x.shape
    H = w_hh.shape[0]
    xw = (jnp.dot(x.astype(jnp.bfloat16).reshape(T * B, D_in),
                  w_ih.astype(jnp.bfloat16),
                  preferred_element_type=jnp.float32).reshape(T, B, H)
          + b_h.reshape(1, -1))

    def step(h, xw_t):
        h_new = jnp.tanh(xw_t + jnp.dot(h, w_hh,
                                        precision=jax.lax.Precision.HIGHEST))
        return h_new, h_new

    h0 = jnp.zeros((B, H), jnp.float32)
    _, hs = jax.lax.scan(step, h0, xw)
    y = (jnp.dot(hs.astype(jnp.bfloat16).reshape(T * B, H),
                 w_ho.astype(jnp.bfloat16),
                 preferred_element_type=jnp.float32).reshape(T, B, -1)
         + b_o.reshape(1, -1))
    return y


# ----------------------------------------------------------------------------
# AbstractModel.forward contract
# ----------------------------------------------------------------------------
def forward(data, params):
    """Mirror of AbstractModel.forward: returns {'inputs','labels','outputs'}."""
    x = data['inputs']
    outputs = rnn_forward_pallas(x, *params)
    return {'inputs': x, 'labels': data['labels'], 'outputs': outputs}


if __name__ == "__main__":
    # Small, module-consistent shapes: seq T=8, batch B=8, input D_in=32,
    # hidden H=64, output D_out=16.
    T, B, D_in, H, D_out = 8, 8, 32, 64, 16

    key = jax.random.PRNGKey(0)
    kx, kl, k1, k2, k3, k4, k5 = jax.random.split(key, 7)

    x = jax.random.normal(kx, (T, B, D_in), dtype=jnp.float32)
    labels = jax.random.normal(kl, (T, B, D_out), dtype=jnp.float32)

    w_ih = 0.1 * jax.random.normal(k1, (D_in, H), dtype=jnp.float32)
    w_hh = 0.1 * jax.random.normal(k2, (H, H), dtype=jnp.float32)
    b_h = 0.01 * jax.random.normal(k3, (1, H), dtype=jnp.float32)
    w_ho = 0.1 * jax.random.normal(k4, (H, D_out), dtype=jnp.float32)
    b_o = 0.01 * jax.random.normal(k5, (1, D_out), dtype=jnp.float32)

    params = (w_ih, w_hh, b_h, w_ho, b_o)

    outs = forward({'inputs': x, 'labels': labels}, params)
    y = jax.block_until_ready(outs['outputs'])

    y_ref = jax.block_until_ready(rnn_forward_ref(x, w_ih, w_hh, b_h, w_ho, b_o))
    assert y.shape == (T, B, D_out), y.shape
    assert jnp.allclose(y, y_ref, atol=2e-2, rtol=2e-2), \
        float(jnp.max(jnp.abs(y - y_ref)))

    print("KERNEL_OK")
</pallas_src>

<mosaic_0001>
module attributes {stable_mosaic.version = 11 : i64} {
  func.func @_rnn_chunk_kernel(%arg0: i32, %arg1: i32, %arg2: memref<1x64x32xbf16, #tpu.memory_space<vmem>>, %arg3: memref<32x128xbf16, #tpu.memory_space<vmem>>, %arg4: memref<128x128xf32, #tpu.memory_space<vmem>>, %arg5: memref<1x128xf32, #tpu.memory_space<vmem>>, %arg6: memref<128x128xbf16, #tpu.memory_space<vmem>>, %arg7: memref<1x128xf32, #tpu.memory_space<vmem>>, %arg8: memref<1x64x128xf32, #tpu.memory_space<vmem>>, %arg9: memref<8x128xf32, #tpu.memory_space<vmem>>, %arg10: memref<64x128xf32, #tpu.memory_space<vmem>>) attributes {dimension_semantics = [#tpu.dimension_semantics<parallel>, #tpu.dimension_semantics<arbitrary>], iteration_bounds = array<i64: 1, 1>, scalar_prefetch = 0 : i64, scratch_operands = 2 : i64, tpu.core_type = #tpu.core_type<tc>, window_params = [{transform_indices = @transform_0, window_bounds = array<i64: 1, 64, 32>}, {pipeline_mode = #tpu.pipeline_mode<synchronous>, transform_indices = @transform_1, window_bounds = array<i64: 32, 128>}, {pipeline_mode = #tpu.pipeline_mode<synchronous>, transform_indices = @transform_2, window_bounds = array<i64: 128, 128>}, {pipeline_mode = #tpu.pipeline_mode<synchronous>, transform_indices = @transform_3, window_bounds = array<i64: 1, 128>}, {pipeline_mode = #tpu.pipeline_mode<synchronous>, transform_indices = @transform_4, window_bounds = array<i64: 128, 128>}, {pipeline_mode = #tpu.pipeline_mode<synchronous>, transform_indices = @transform_5, window_bounds = array<i64: 1, 128>}, {transform_indices = @transform_6, window_bounds = array<i64: 1, 64, 128>}]} {
    %c0_i32 = arith.constant 0 : i32
    %0 = arith.cmpi eq, %arg1, %c0_i32 : i32
    %1 = arith.extui %0 : i1 to i32
    %c0_i32_0 = arith.constant 0 : i32
    %2 = arith.cmpi ne, %1, %c0_i32_0 : i32
    scf.if %2 {
      %cst_58 = arith.constant 0.000000e+00 : f32
      %96 = vector.broadcast %cst_58 : f32 to vector<8x128xf32>
      %c0_59 = arith.constant 0 : index
      %c0_60 = arith.constant 0 : index
      %97 = vector.load %arg9[%c0_59, %c0_60] : memref<8x128xf32, #tpu.memory_space<vmem>>, vector<8x128xf32>
      tpu.vector_store %arg9[%c0_59, %c0_60], %96 {strides = array<i32>} : memref<8x128xf32, #tpu.memory_space<vmem>>, vector<8x128xf32>,
    } else {
    }
    %c0 = arith.constant 0 : index
    %c0_1 = arith.constant 0 : index
    %c0_2 = arith.constant 0 : index
    %3 = vector.load %arg2[%c0, %c0_1, %c0_2] : memref<1x64x32xbf16, #tpu.memory_space<vmem>>, vector<1x64x32xbf16>
    %4 = vector.shape_cast %3 : vector<1x64x32xbf16> to vector<64x32xbf16>
    %c0_3 = arith.constant 0 : index
    %c0_4 = arith.constant 0 : index
    %5 = vector.load %arg3[%c0_3, %c0_4] : memref<32x128xbf16, #tpu.memory_space<vmem>>, vector<32x128xbf16>
    %cst = arith.constant dense<0.000000e+00> : vector<64x128xf32>
    %6 = tpu.matmul %4, %5, %cst {dimension_numbers = #tpu.dot_dimension_numbers<[1], [0], [0], [1], [0, 0, 1, 1], [], []>} : vector<64x32xbf16>, vector<32x128xbf16>, vector<64x128xf32> -> vector<64x128xf32>
    %c0_5 = arith.constant 0 : index
    %c0_6 = arith.constant 0 : index
    %7 = vector.load %arg5[%c0_5, %c0_6] : memref<1x128xf32, #tpu.memory_space<vmem>>, vector<1x128xf32>
    %8 = vector.broadcast %7 : vector<1x128xf32> to vector<64x128xf32>
    %9 = arith.addf %6, %8 : vector<64x128xf32>
    %c0_7 = arith.constant 0 : index
    %c0_8 = arith.constant 0 : index
    %10 = vector.load %arg10[%c0_7, %c0_8] : memref<64x128xf32, #tpu.memory_space<vmem>>, vector<64x128xf32>
    tpu.vector_store %arg10[%c0_7, %c0_8], %9 {strides = array<i32>} : memref<64x128xf32, #tpu.memory_space<vmem>>, vector<64x128xf32>,
    %c0_9 = arith.constant 0 : index
    %c0_10 = arith.constant 0 : index
    %11 = vector.load %arg4[%c0_9, %c0_10] : memref<128x128xf32, #tpu.memory_space<vmem>>, vector<128x128xf32>
    %c0_11 = arith.constant 0 : index
    %c0_12 = arith.constant 0 : index
    %12 = vector.load %arg9[%c0_11, %c0_12] : memref<8x128xf32, #tpu.memory_space<vmem>>, vector<8x128xf32>
    %c0_i32_13 = arith.constant 0 : i32
    %c8_i32 = arith.constant 8 : i32
    %13 = arith.muli %c0_i32_13, %c8_i32 : i32
    %14 = tpu.assume_multiple %13, 8 : i32
    %15 = arith.index_cast %14 : i32 to index
    %c0_14 = arith.constant 0 : index
    %16 = vector.load %arg10[%15, %c0_14] : memref<64x128xf32, #tpu.memory_space<vmem>>, vector<8x128xf32>
    %cst_15 = arith.constant dense<0.000000e+00> : vector<8x128xf32>
    %17 = tpu.matmul %12, %11, %cst_15 {dimension_numbers = #tpu.dot_dimension_numbers<[1], [0], [0], [1], [0, 0, 1, 1], [], []>} : vector<8x128xf32>, vector<128x128xf32>, vector<8x128xf32> -> vector<8x128xf32>
    %18 = arith.addf %16, %17 : vector<8x128xf32>
    %19 = math.tanh %18 : vector<8x128xf32>
    %20 = arith.index_cast %14 : i32 to index
    %c0_16 = arith.constant 0 : index
    %21 = vector.load %arg10[%20, %c0_16] : memref<64x128xf32, #tpu.memory_space<vmem>>, vector<8x128xf32>
    tpu.vector_store %arg10[%20, %c0_16], %19 {strides = array<i32>} : memref<64x128xf32, #tpu.memory_space<vmem>>, vector<8x128xf32>,
    %c1_i32 = arith.constant 1 : i32
    %c8_i32_17 = arith.constant 8 : i32
    %22 = arith.muli %c1_i32, %c8_i32_17 : i32
    %23 = tpu.assume_multiple %22, 8 : i32
    %24 = arith.index_cast %23 : i32 to index
    %c0_18 = arith.constant 0 : index
    %25 = vector.load %arg10[%24, %c0_18] : memref<64x128xf32, #tpu.memory_space<vmem>>, vector<8x128xf32>
    %cst_19 = arith.constant dense<0.000000e+00> : vector<8x128xf32>
    %26 = tpu.matmul %19, %11, %cst_19 {dimension_numbers = #tpu.dot_dimension_numbers<[1], [0], [0], [1], [0, 0, 1, 1], [], []>} : vector<8x128xf32>, vector<128x128xf32>, vector<8x128xf32> -> vector<8x128xf32>
    %27 = arith.addf %25, %26 : vector<8x128xf32>
    %28 = math.tanh %27 : vector<8x128xf32>
    %29 = arith.index_cast %23 : i32 to index
    %c0_20 = arith.constant 0 : index
    %30 = vector.load %arg10[%29, %c0_20] : memref<64x128xf32, #tpu.memory_space<vmem>>, vector<8x128xf32>
    tpu.vector_store %arg10[%29, %c0_20], %28 {strides = array<i32>} : memref<64x128xf32, #tpu.memory_space<vmem>>, vector<8x128xf32>,
    %c2_i32 = arith.constant 2 : i32
    %c8_i32_21 = arith.constant 8 : i32
    %31 = arith.muli %c2_i32, %c8_i32_21 : i32
    %32 = tpu.assume_multiple %31, 8 : i32
    %33 = arith.index_cast %32 : i32 to index
    %c0_22 = arith.constant 0 : index
    %34 = vector.load %arg10[%33, %c0_22] : memref<64x128xf32, #tpu.memory_space<vmem>>, vector<8x128xf32>
    %cst_23 = arith.constant dense<0.000000e+00> : vector<8x128xf32>
    %35 = tpu.matmul %28, %11, %cst_23 {dimension_numbers = #tpu.dot_dimension_numbers<[1], [0], [0], [1], [0, 0, 1, 1], [], []>} : vector<8x128xf32>, vector<128x128xf32>, vector<8x128xf32> -> vector<8x128xf32>
    %36 = arith.addf %34, %35 : vector<8x128xf32>
    %37 = math.tanh %36 : vector<8x128xf32>
    %38 = arith.index_cast %32 : i32 to index
    %c0_24 = arith.constant 0 : index
    %39 = vector.load %arg10[%38, %c0_24] : memref<64x128xf32, #tpu.memory_space<vmem>>, vector<8x128xf32>
    tpu.vector_store %arg10[%38, %c0_24], %37 {strides = array<i32>} : memref<64x128xf32, #tpu.memory_space<vmem>>, vector<8x128xf32>,
    %c3_i32 = arith.constant 3 : i32
    %c8_i32_25 = arith.constant 8 : i32
    %40 = arith.muli %c3_i32, %c8_i32_25 : i32
    %41 = tpu.assume_multiple %40, 8 : i32
    %42 = arith.index_cast %41 : i32 to index
    %c0_26 = arith.constant 0 : index
    %43 = vector.load %arg10[%42, %c0_26] : memref<64x128xf32, #tpu.memory_space<vmem>>, vector<8x128xf32>
    %cst_27 = arith.constant dense<0.000000e+00> : vector<8x128xf32>
    %44 = tpu.matmul %37, %11, %cst_27 {dimension_numbers = #tpu.dot_dimension_numbers<[1], [0], [0], [1], [0, 0, 1, 1], [], []>} : vector<8x128xf32>, vector<128x128xf32>, vector<8x128xf32> -> vector<8x128xf32>
    %45 = arith.addf %43, %44 : vector<8x128xf32>
    %46 = math.tanh %45 : vector<8x128xf32>
    %47 = arith.index_cast %41 : i32 to index
    %c0_28 = arith.constant 0 : index
    %48 = vector.load %arg10[%47, %c0_28] : memref<64x128xf32, #tpu.memory_space<vmem>>, vector<8x128xf32>
    tpu.vector_store %arg10[%47, %c0_28], %46 {strides = array<i32>} : memref<64x128xf32, #tpu.memory_space<vmem>>, vector<8x128xf32>,
    %c4_i32 = arith.constant 4 : i32
    %c8_i32_29 = arith.constant 8 : i32
    %49 = arith.muli %c4_i32, %c8_i32_29 : i32
    %50 = tpu.assume_multiple %49, 8 : i32
    %51 = arith.index_cast %50 : i32 to index
    %c0_30 = arith.constant 0 : index
    %52 = vector.load %arg10[%51, %c0_30] : memref<64x128xf32, #tpu.memory_space<vmem>>, vector<8x128xf32>
    %cst_31 = arith.constant dense<0.000000e+00> : vector<8x128xf32>
    %53 = tpu.matmul %46, %11, %cst_31 {dimension_numbers = #tpu.dot_dimension_numbers<[1], [0], [0], [1], [0, 0, 1, 1], [], []>} : vector<8x128xf32>, vector<128x128xf32>, vector<8x128xf32> -> vector<8x128xf32>
    %54 = arith.addf %52, %53 : vector<8x128xf32>
    %55 = math.tanh %54 : vector<8x128xf32>
    %56 = arith.index_cast %50 : i32 to index
    %c0_32 = arith.constant 0 : index
    %57 = vector.load %arg10[%56, %c0_32] : memref<64x128xf32, #tpu.memory_space<vmem>>, vector<8x128xf32>
    tpu.vector_store %arg10[%56, %c0_32], %55 {strides = array<i32>} : memref<64x128xf32, #tpu.memory_space<vmem>>, vector<8x128xf32>,
    %c5_i32 = arith.constant 5 : i32
    %c8_i32_33 = arith.constant 8 : i32
    %58 = arith.muli %c5_i32, %c8_i32_33 : i32
    %59 = tpu.assume_multiple %58, 8 : i32
    %60 = arith.index_cast %59 : i32 to index
    %c0_34 = arith.constant 0 : index
    %61 = vector.load %arg10[%60, %c0_34] : memref<64x128xf32, #tpu.memory_space<vmem>>, vector<8x128xf32>
    %cst_35 = arith.constant dense<0.000000e+00> : vector<8x128xf32>
    %62 = tpu.matmul %55, %11, %cst_35 {dimension_numbers = #tpu.dot_dimension_numbers<[1], [0], [0], [1], [0, 0, 1, 1], [], []>} : vector<8x128xf32>, vector<128x128xf32>, vector<8x128xf32> -> vector<8x128xf32>
    %63 = arith.addf %61, %62 : vector<8x128xf32>
    %64 = math.tanh %63 : vector<8x128xf32>
    %65 = arith.index_cast %59 : i32 to index
    %c0_36 = arith.constant 0 : index
    %66 = vector.load %arg10[%65, %c0_36] : memref<64x128xf32, #tpu.memory_space<vmem>>, vector<8x128xf32>
    tpu.vector_store %arg10[%65, %c0_36], %64 {strides = array<i32>} : memref<64x128xf32, #tpu.memory_space<vmem>>, vector<8x128xf32>,
    %c6_i32 = arith.constant 6 : i32
    %c8_i32_37 = arith.constant 8 : i32
    %67 = arith.muli %c6_i32, %c8_i32_37 : i32
    %68 = tpu.assume_multiple %67, 8 : i32
    %69 = arith.index_cast %68 : i32 to index
    %c0_38 = arith.constant 0 : index
    %70 = vector.load %arg10[%69, %c0_38] : memref<64x128xf32, #tpu.memory_space<vmem>>, vector<8x128xf32>
    %cst_39 = arith.constant dense<0.000000e+00> : vector<8x128xf32>
    %71 = tpu.matmul %64, %11, %cst_39 {dimension_numbers = #tpu.dot_dimension_numbers<[1], [0], [0], [1], [0, 0, 1, 1], [], []>} : vector<8x128xf32>, vector<128x128xf32>, vector<8x128xf32> -> vector<8x128xf32>
    %72 = arith.addf %70, %71 : vector<8x128xf32>
    %73 = math.tanh %72 : vector<8x128xf32>
    %74 = arith.index_cast %68 : i32 to index
    %c0_40 = arith.constant 0 : index
    %75 = vector.load %arg10[%74, %c0_40] : memref<64x128xf32, #tpu.memory_space<vmem>>, vector<8x128xf32>
    tpu.vector_store %arg10[%74, %c0_40], %73 {strides = array<i32>} : memref<64x128xf32, #tpu.memory_space<vmem>>, vector<8x128xf32>,
    %c7_i32 = arith.constant 7 : i32
    %c8_i32_41 = arith.constant 8 : i32
    %76 = arith.muli %c7_i32, %c8_i32_41 : i32
    %77 = tpu.assume_multiple %76, 8 : i32
    %78 = arith.index_cast %77 : i32 to index
    %c0_42 = arith.constant 0 : index
    %79 = vector.load %arg10[%78, %c0_42] : memref<64x128xf32, #tpu.memory_space<vmem>>, vector<8x128xf32>
    %cst_43 = arith.constant dense<0.000000e+00> : vector<8x128xf32>
    %80 = tpu.matmul %73, %11, %cst_43 {dimension_numbers = #tpu.dot_dimension_numbers<[1], [0], [0], [1], [0, 0, 1, 1], [], []>} : vector<8x128xf32>, vector<128x128xf32>, vector<8x128xf32> -> vector<8x128xf32>
    %81 = arith.addf %79, %80 : vector<8x128xf32>
    %82 = math.tanh %81 : vector<8x128xf32>
    %83 = arith.index_cast %77 : i32 to index
    %c0_44 = arith.constant 0 : index
    %84 = vector.load %arg10[%83, %c0_44] : memref<64x128xf32, #tpu.memory_space<vmem>>, vector<8x128xf32>
    tpu.vector_store %arg10[%83, %c0_44], %82 {strides = array<i32>} : memref<64x128xf32, #tpu.memory_space<vmem>>, vector<8x128xf32>,
    %c8_i32_45 = arith.constant 8 : i32
    %c0_46 = arith.constant 0 : index
    %c0_47 = arith.constant 0 : index
    %85 = vector.load %arg9[%c0_46, %c0_47] : memref<8x128xf32, #tpu.memory_space<vmem>>, vector<8x128xf32>
    tpu.vector_store %arg9[%c0_46, %c0_47], %82 {strides = array<i32>} : memref<8x128xf32, #tpu.memory_space<vmem>>, vector<8x128xf32>,
    %c0_48 = arith.constant 0 : index
    %c0_49 = arith.constant 0 : index
    %86 = vector.load %arg10[%c0_48, %c0_49] : memref<64x128xf32, #tpu.memory_space<vmem>>, vector<64x128xf32>
    %87 = arith.truncf %86 : vector<64x128xf32> to vector<64x128xbf16>
    %c0_50 = arith.constant 0 : index
    %c0_51 = arith.constant 0 : index
    %88 = vector.load %arg6[%c0_50, %c0_51] : memref<128x128xbf16, #tpu.memory_space<vmem>>, vector<128x128xbf16>
    %cst_52 = arith.constant dense<0.000000e+00> : vector<64x128xf32>
    %89 = tpu.matmul %87, %88, %cst_52 {dimension_numbers = #tpu.dot_dimension_numbers<[1], [0], [0], [1], [0, 0, 1, 1], [], []>} : vector<64x128xbf16>, vector<128x128xbf16>, vector<64x128xf32> -> vector<64x128xf32>
    %c0_53 = arith.constant 0 : index
    %c0_54 = arith.constant 0 : index
    %90 = vector.load %arg7[%c0_53, %c0_54] : memref<1x128xf32, #tpu.memory_space<vmem>>, vector<1x128xf32>
    %91 = vector.broadcast %90 : vector<1x128xf32> to vector<64x128xf32>
    %92 = arith.addf %89, %91 : vector<64x128xf32>
    %c0_55 = arith.constant 0 : index
    %c0_56 = arith.constant 0 : index
    %c0_57 = arith.constant 0 : index
    %93 = vector.load %arg8[%c0_55, %c0_56, %c0_57] : memref<1x64x128xf32, #tpu.memory_space<vmem>>, vector<1x64x128xf32>
    %94 = vector.shape_cast %93 : vector<1x64x128xf32> to vector<64x128xf32>
    %95 = vector.shape_cast %92 : vector<64x128xf32> to vector<1x64x128xf32>
    tpu.vector_store %arg8[%c0_55, %c0_56, %c0_57], %95 {strides = array<i32>} : memref<1x64x128xf32, #tpu.memory_space<vmem>>, vector<1x64x128xf32>,
    return
  }
  func.func @transform_0(%arg0: i32, %arg1: i32) -> (i32, i32, i32) {
    %c0_i32 = arith.constant 0 : i32
    %c0_i32_0 = arith.constant 0 : i32
    return %arg0, %arg1, %c0_i32 : i32, i32, i32
  }
  func.func @transform_1(%arg0: i32, %arg1: i32) -> (i32, i32) {
    %c0_i32 = arith.constant 0 : i32
    %c0_i32_0 = arith.constant 0 : i32
    %c0_i32_1 = arith.constant 0 : i32
    return %c0_i32, %c0_i32_0 : i32, i32
  }
  func.func @transform_2(%arg0: i32, %arg1: i32) -> (i32, i32) {
    %c0_i32 = arith.constant 0 : i32
    %c0_i32_0 = arith.constant 0 : i32
    %c0_i32_1 = arith.constant 0 : i32
    return %c0_i32, %c0_i32_0 : i32, i32
  }
  func.func @transform_3(%arg0: i32, %arg1: i32) -> (i32, i32) {
    %c0_i32 = arith.constant 0 : i32
    %c0_i32_0 = arith.constant 0 : i32
    %c0_i32_1 = arith.constant 0 : i32
    return %c0_i32, %c0_i32_0 : i32, i32
  }
  func.func @transform_4(%arg0: i32, %arg1: i32) -> (i32, i32) {
    %c0_i32 = arith.constant 0 : i32
    %c0_i32_0 = arith.constant 0 : i32
    %c0_i32_1 = arith.constant 0 : i32
    return %c0_i32, %c0_i32_0 : i32, i32
  }
  func.func @transform_5(%arg0: i32, %arg1: i32) -> (i32, i32) {
    %c0_i32 = arith.constant 0 : i32
    %c0_i32_0 = arith.constant 0 : i32
    %c0_i32_1 = arith.constant 0 : i32
    return %c0_i32, %c0_i32_0 : i32, i32
  }
  func.func @transform_6(%arg0: i32, %arg1: i32) -> (i32, i32, i32) {
    %c0_i32 = arith.constant 0 : i32
    %c0_i32_0 = arith.constant 0 : i32
    return %arg0, %arg1, %c0_i32 : i32, i32, i32
  }
}

module attributes {stable_mosaic.version = 11 : i64} {
  func.func @_rnn_chunk_kernel(%arg0: i32, %arg1: i32, %arg2: memref<1x64x32xbf16, #tpu.memory_space<vmem>>, %arg3: memref<32x128xbf16, #tpu.memory_space<vmem>>, %arg4: memref<128x128xf32, #tpu.memory_space<vmem>>, %arg5: memref<1x128xf32, #tpu.memory_space<vmem>>, %arg6: memref<128x128xbf16, #tpu.memory_space<vmem>>, %arg7: memref<1x128xf32, #tpu.memory_space<vmem>>, %arg8: memref<1x64x128xf32, #tpu.memory_space<vmem>>, %arg9: memref<8x128xf32, #tpu.memory_space<vmem>>, %arg10: memref<64x128xf32, #tpu.memory_space<vmem>>) attributes {dimension_semantics = [#tpu.dimension_semantics<parallel>, #tpu.dimension_semantics<arbitrary>], iteration_bounds = array<i64: 1, 1>, scalar_prefetch = 0 : i64, scratch_operands = 2 : i64, tpu.core_type = #tpu.core_type<tc>, window_params = [{transform_indices = @transform_0, window_bounds = array<i64: 1, 64, 32>}, {pipeline_mode = #tpu.pipeline_mode<synchronous>, transform_indices = @transform_1, window_bounds = array<i64: 32, 128>}, {pipeline_mode = #tpu.pipeline_mode<synchronous>, transform_indices = @transform_2, window_bounds = array<i64: 128, 128>}, {pipeline_mode = #tpu.pipeline_mode<synchronous>, transform_indices = @transform_3, window_bounds = array<i64: 1, 128>}, {pipeline_mode = #tpu.pipeline_mode<synchronous>, transform_indices = @transform_4, window_bounds = array<i64: 128, 128>}, {pipeline_mode = #tpu.pipeline_mode<synchronous>, transform_indices = @transform_5, window_bounds = array<i64: 1, 128>}, {transform_indices = @transform_6, window_bounds = array<i64: 1, 64, 128>}]} {
    %c0_i32 = arith.constant 0 : i32
    %0 = arith.cmpi eq, %arg1, %c0_i32 : i32
    %1 = arith.extui %0 : i1 to i32
    %c0_i32_0 = arith.constant 0 : i32
    %2 = arith.cmpi ne, %1, %c0_i32_0 : i32
    scf.if %2 {
      %cst_58 = arith.constant 0.000000e+00 : f32
      %96 = vector.broadcast %cst_58 : f32 to vector<8x128xf32>
      %c0_59 = arith.constant 0 : index
      %c0_60 = arith.constant 0 : index
      %97 = vector.load %arg9[%c0_59, %c0_60] : memref<8x128xf32, #tpu.memory_space<vmem>>, vector<8x128xf32>
      tpu.vector_store %arg9[%c0_59, %c0_60], %96 {strides = array<i32>} : memref<8x128xf32, #tpu.memory_space<vmem>>, vector<8x128xf32>,
    } else {
    }
    %c0 = arith.constant 0 : index
    %c0_1 = arith.constant 0 : index
    %c0_2 = arith.constant 0 : index
    %3 = vector.load %arg2[%c0, %c0_1, %c0_2] : memref<1x64x32xbf16, #tpu.memory_space<vmem>>, vector<1x64x32xbf16>
    %4 = vector.shape_cast %3 : vector<1x64x32xbf16> to vector<64x32xbf16>
    %c0_3 = arith.constant 0 : index
    %c0_4 = arith.constant 0 : index
    %5 = vector.load %arg3[%c0_3, %c0_4] : memref<32x128xbf16, #tpu.memory_space<vmem>>, vector<32x128xbf16>
    %cst = arith.constant dense<0.000000e+00> : vector<64x128xf32>
    %6 = tpu.matmul %4, %5, %cst {dimension_numbers = #tpu.dot_dimension_numbers<[1], [0], [0], [1], [0, 0, 1, 1], [], []>} : vector<64x32xbf16>, vector<32x128xbf16>, vector<64x128xf32> -> vector<64x128xf32>
    %c0_5 = arith.constant 0 : index
    %c0_6 = arith.constant 0 : index
    %7 = vector.load %arg5[%c0_5, %c0_6] : memref<1x128xf32, #tpu.memory_space<vmem>>, vector<1x128xf32>
    %8 = vector.broadcast %7 : vector<1x128xf32> to vector<64x128xf32>
    %9 = arith.addf %6, %8 : vector<64x128xf32>
    %c0_7 = arith.constant 0 : index
    %c0_8 = arith.constant 0 : index
    %10 = vector.load %arg10[%c0_7, %c0_8] : memref<64x128xf32, #tpu.memory_space<vmem>>, vector<64x128xf32>
    tpu.vector_store %arg10[%c0_7, %c0_8], %9 {strides = array<i32>} : memref<64x128xf32, #tpu.memory_space<vmem>>, vector<64x128xf32>,
    %c0_9 = arith.constant 0 : index
    %c0_10 = arith.constant 0 : index
    %11 = vector.load %arg4[%c0_9, %c0_10] : memref<128x128xf32, #tpu.memory_space<vmem>>, vector<128x128xf32>
    %c0_11 = arith.constant 0 : index
    %c0_12 = arith.constant 0 : index
    %12 = vector.load %arg9[%c0_11, %c0_12] : memref<8x128xf32, #tpu.memory_space<vmem>>, vector<8x128xf32>
    %c0_i32_13 = arith.constant 0 : i32
    %c8_i32 = arith.constant 8 : i32
    %13 = arith.muli %c0_i32_13, %c8_i32 : i32
    %14 = tpu.assume_multiple %13, 8 : i32
    %15 = arith.index_cast %14 : i32 to index
    %c0_14 = arith.constant 0 : index
    %16 = vector.load %arg10[%15, %c0_14] : memref<64x128xf32, #tpu.memory_space<vmem>>, vector<8x128xf32>
    %cst_15 = arith.constant dense<0.000000e+00> : vector<8x128xf32>
    %17 = tpu.matmul %12, %11, %cst_15 {dimension_numbers = #tpu.dot_dimension_numbers<[1], [0], [0], [1], [0, 0, 1, 1], [], []>} : vector<8x128xf32>, vector<128x128xf32>, vector<8x128xf32> -> vector<8x128xf32>
    %18 = arith.addf %16, %17 : vector<8x128xf32>
    %19 = math.tanh %18 : vector<8x128xf32>
    %20 = arith.index_cast %14 : i32 to index
    %c0_16 = arith.constant 0 : index
    %21 = vector.load %arg10[%20, %c0_16] : memref<64x128xf32, #tpu.memory_space<vmem>>, vector<8x128xf32>
    tpu.vector_store %arg10[%20, %c0_16], %19 {strides = array<i32>} : memref<64x128xf32, #tpu.memory_space<vmem>>, vector<8x128xf32>,
    %c1_i32 = arith.constant 1 : i32
    %c8_i32_17 = arith.constant 8 : i32
    %22 = arith.muli %c1_i32, %c8_i32_17 : i32
    %23 = tpu.assume_multiple %22, 8 : i32
    %24 = arith.index_cast %23 : i32 to index
    %c0_18 = arith.constant 0 : index
    %25 = vector.load %arg10[%24, %c0_18] : memref<64x128xf32, #tpu.memory_space<vmem>>, vector<8x128xf32>
    %cst_19 = arith.constant dense<0.000000e+00> : vector<8x128xf32>
    %26 = tpu.matmul %19, %11, %cst_19 {dimension_numbers = #tpu.dot_dimension_numbers<[1], [0], [0], [1], [0, 0, 1, 1], [], []>} : vector<8x128xf32>, vector<128x128xf32>, vector<8x128xf32> -> vector<8x128xf32>
    %27 = arith.addf %25, %26 : vector<8x128xf32>
    %28 = math.tanh %27 : vector<8x128xf32>
    %29 = arith.index_cast %23 : i32 to index
    %c0_20 = arith.constant 0 : index
    %30 = vector.load %arg10[%29, %c0_20] : memref<64x128xf32, #tpu.memory_space<vmem>>, vector<8x128xf32>
    tpu.vector_store %arg10[%29, %c0_20], %28 {strides = array<i32>} : memref<64x128xf32, #tpu.memory_space<vmem>>, vector<8x128xf32>,
    %c2_i32 = arith.constant 2 : i32
    %c8_i32_21 = arith.constant 8 : i32
    %31 = arith.muli %c2_i32, %c8_i32_21 : i32
    %32 = tpu.assume_multiple %31, 8 : i32
    %33 = arith.index_cast %32 : i32 to index
    %c0_22 = arith.constant 0 : index
    %34 = vector.load %arg10[%33, %c0_22] : memref<64x128xf32, #tpu.memory_space<vmem>>, vector<8x128xf32>
    %cst_23 = arith.constant dense<0.000000e+00> : vector<8x128xf32>
    %35 = tpu.matmul %28, %11, %cst_23 {dimension_numbers = #tpu.dot_dimension_numbers<[1], [0], [0], [1], [0, 0, 1, 1], [], []>} : vector<8x128xf32>, vector<128x128xf32>, vector<8x128xf32> -> vector<8x128xf32>
    %36 = arith.addf %34, %35 : vector<8x128xf32>
    %37 = math.tanh %36 : vector<8x128xf32>
    %38 = arith.index_cast %32 : i32 to index
    %c0_24 = arith.constant 0 : index
    %39 = vector.load %arg10[%38, %c0_24] : memref<64x128xf32, #tpu.memory_space<vmem>>, vector<8x128xf32>
    tpu.vector_store %arg10[%38, %c0_24], %37 {strides = array<i32>} : memref<64x128xf32, #tpu.memory_space<vmem>>, vector<8x128xf32>,
    %c3_i32 = arith.constant 3 : i32
    %c8_i32_25 = arith.constant 8 : i32
    %40 = arith.muli %c3_i32, %c8_i32_25 : i32
    %41 = tpu.assume_multiple %40, 8 : i32
    %42 = arith.index_cast %41 : i32 to index
    %c0_26 = arith.constant 0 : index
    %43 = vector.load %arg10[%42, %c0_26] : memref<64x128xf32, #tpu.memory_space<vmem>>, vector<8x128xf32>
    %cst_27 = arith.constant dense<0.000000e+00> : vector<8x128xf32>
    %44 = tpu.matmul %37, %11, %cst_27 {dimension_numbers = #tpu.dot_dimension_numbers<[1], [0], [0], [1], [0, 0, 1, 1], [], []>} : vector<8x128xf32>, vector<128x128xf32>, vector<8x128xf32> -> vector<8x128xf32>
    %45 = arith.addf %43, %44 : vector<8x128xf32>
    %46 = math.tanh %45 : vector<8x128xf32>
    %47 = arith.index_cast %41 : i32 to index
    %c0_28 = arith.constant 0 : index
    %48 = vector.load %arg10[%47, %c0_28] : memref<64x128xf32, #tpu.memory_space<vmem>>, vector<8x128xf32>
    tpu.vector_store %arg10[%47, %c0_28], %46 {strides = array<i32>} : memref<64x128xf32, #tpu.memory_space<vmem>>, vector<8x128xf32>,
    %c4_i32 = arith.constant 4 : i32
    %c8_i32_29 = arith.constant 8 : i32
    %49 = arith.muli %c4_i32, %c8_i32_29 : i32
    %50 = tpu.assume_multiple %49, 8 : i32
    %51 = arith.index_cast %50 : i32 to index
    %c0_30 = arith.constant 0 : index
    %52 = vector.load %arg10[%51, %c0_30] : memref<64x128xf32, #tpu.memory_space<vmem>>, vector<8x128xf32>
    %cst_31 = arith.constant dense<0.000000e+00> : vector<8x128xf32>
    %53 = tpu.matmul %46, %11, %cst_31 {dimension_numbers = #tpu.dot_dimension_numbers<[1], [0], [0], [1], [0, 0, 1, 1], [], []>} : vector<8x128xf32>, vector<128x128xf32>, vector<8x128xf32> -> vector<8x128xf32>
    %54 = arith.addf %52, %53 : vector<8x128xf32>
    %55 = math.tanh %54 : vector<8x128xf32>
    %56 = arith.index_cast %50 : i32 to index
    %c0_32 = arith.constant 0 : index
    %57 = vector.load %arg10[%56, %c0_32] : memref<64x128xf32, #tpu.memory_space<vmem>>, vector<8x128xf32>
    tpu.vector_store %arg10[%56, %c0_32], %55 {strides = array<i32>} : memref<64x128xf32, #tpu.memory_space<vmem>>, vector<8x128xf32>,
    %c5_i32 = arith.constant 5 : i32
    %c8_i32_33 = arith.constant 8 : i32
    %58 = arith.muli %c5_i32, %c8_i32_33 : i32
    %59 = tpu.assume_multiple %58, 8 : i32
    %60 = arith.index_cast %59 : i32 to index
    %c0_34 = arith.constant 0 : index
    %61 = vector.load %arg10[%60, %c0_34] : memref<64x128xf32, #tpu.memory_space<vmem>>, vector<8x128xf32>
    %cst_35 = arith.constant dense<0.000000e+00> : vector<8x128xf32>
    %62 = tpu.matmul %55, %11, %cst_35 {dimension_numbers = #tpu.dot_dimension_numbers<[1], [0], [0], [1], [0, 0, 1, 1], [], []>} : vector<8x128xf32>, vector<128x128xf32>, vector<8x128xf32> -> vector<8x128xf32>
    %63 = arith.addf %61, %62 : vector<8x128xf32>
    %64 = math.tanh %63 : vector<8x128xf32>
    %65 = arith.index_cast %59 : i32 to index
    %c0_36 = arith.constant 0 : index
    %66 = vector.load %arg10[%65, %c0_36] : memref<64x128xf32, #tpu.memory_space<vmem>>, vector<8x128xf32>
    tpu.vector_store %arg10[%65, %c0_36], %64 {strides = array<i32>} : memref<64x128xf32, #tpu.memory_space<vmem>>, vector<8x128xf32>,
    %c6_i32 = arith.constant 6 : i32
    %c8_i32_37 = arith.constant 8 : i32
    %67 = arith.muli %c6_i32, %c8_i32_37 : i32
    %68 = tpu.assume_multiple %67, 8 : i32
    %69 = arith.index_cast %68 : i32 to index
    %c0_38 = arith.constant 0 : index
    %70 = vector.load %arg10[%69, %c0_38] : memref<64x128xf32, #tpu.memory_space<vmem>>, vector<8x128xf32>
    %cst_39 = arith.constant dense<0.000000e+00> : vector<8x128xf32>
    %71 = tpu.matmul %64, %11, %cst_39 {dimension_numbers = #tpu.dot_dimension_numbers<[1], [0], [0], [1], [0, 0, 1, 1], [], []>} : vector<8x128xf32>, vector<128x128xf32>, vector<8x128xf32> -> vector<8x128xf32>
    %72 = arith.addf %70, %71 : vector<8x128xf32>
    %73 = math.tanh %72 : vector<8x128xf32>
    %74 = arith.index_cast %68 : i32 to index
    %c0_40 = arith.constant 0 : index
    %75 = vector.load %arg10[%74, %c0_40] : memref<64x128xf32, #tpu.memory_space<vmem>>, vector<8x128xf32>
    tpu.vector_store %arg10[%74, %c0_40], %73 {strides = array<i32>} : memref<64x128xf32, #tpu.memory_space<vmem>>, vector<8x128xf32>,
    %c7_i32 = arith.constant 7 : i32
    %c8_i32_41 = arith.constant 8 : i32
    %76 = arith.muli %c7_i32, %c8_i32_41 : i32
    %77 = tpu.assume_multiple %76, 8 : i32
    %78 = arith.index_cast %77 : i32 to index
    %c0_42 = arith.constant 0 : index
    %79 = vector.load %arg10[%78, %c0_42] : memref<64x128xf32, #tpu.memory_space<vmem>>, vector<8x128xf32>
    %cst_43 = arith.constant dense<0.000000e+00> : vector<8x128xf32>
    %80 = tpu.matmul %73, %11, %cst_43 {dimension_numbers = #tpu.dot_dimension_numbers<[1], [0], [0], [1], [0, 0, 1, 1], [], []>} : vector<8x128xf32>, vector<128x128xf32>, vector<8x128xf32> -> vector<8x128xf32>
    %81 = arith.addf %79, %80 : vector<8x128xf32>
    %82 = math.tanh %81 : vector<8x128xf32>
    %83 = arith.index_cast %77 : i32 to index
    %c0_44 = arith.constant 0 : index
    %84 = vector.load %arg10[%83, %c0_44] : memref<64x128xf32, #tpu.memory_space<vmem>>, vector<8x128xf32>
    tpu.vector_store %arg10[%83, %c0_44], %82 {strides = array<i32>} : memref<64x128xf32, #tpu.memory_space<vmem>>, vector<8x128xf32>,
    %c8_i32_45 = arith.constant 8 : i32
    %c0_46 = arith.constant 0 : index
    %c0_47 = arith.constant 0 : index
    %85 = vector.load %arg9[%c0_46, %c0_47] : memref<8x128xf32, #tpu.memory_space<vmem>>, vector<8x128xf32>
    tpu.vector_store %arg9[%c0_46, %c0_47], %82 {strides = array<i32>} : memref<8x128xf32, #tpu.memory_space<vmem>>, vector<8x128xf32>,
    %c0_48 = arith.constant 0 : index
    %c0_49 = arith.constant 0 : index
    %86 = vector.load %arg10[%c0_48, %c0_49] : memref<64x128xf32, #tpu.memory_space<vmem>>, vector<64x128xf32>
    %87 = arith.truncf %86 : vector<64x128xf32> to vector<64x128xbf16>
    %c0_50 = arith.constant 0 : index
    %c0_51 = arith.constant 0 : index
    %88 = vector.load %arg6[%c0_50, %c0_51] : memref<128x128xbf16, #tpu.memory_space<vmem>>, vector<128x128xbf16>
    %cst_52 = arith.constant dense<0.000000e+00> : vector<64x128xf32>
    %89 = tpu.matmul %87, %88, %cst_52 {dimension_numbers = #tpu.dot_dimension_numbers<[1], [0], [0], [1], [0, 0, 1, 1], [], []>} : vector<64x128xbf16>, vector<128x128xbf16>, vector<64x128xf32> -> vector<64x128xf32>
    %c0_53 = arith.constant 0 : index
    %c0_54 = arith.constant 0 : index
    %90 = vector.load %arg7[%c0_53, %c0_54] : memref<1x128xf32, #tpu.memory_space<vmem>>, vector<1x128xf32>
    %91 = vector.broadcast %90 : vector<1x128xf32> to vector<64x128xf32>
    %92 = arith.addf %89, %91 : vector<64x128xf32>
    %c0_55 = arith.constant 0 : index
    %c0_56 = arith.constant 0 : index
    %c0_57 = arith.constant 0 : index
    %93 = vector.load %arg8[%c0_55, %c0_56, %c0_57] : memref<1x64x128xf32, #tpu.memory_space<vmem>>, vector<1x64x128xf32>
    %94 = vector.shape_cast %93 : vector<1x64x128xf32> to vector<64x128xf32>
    %95 = vector.shape_cast %92 : vector<64x128xf32> to vector<1x64x128xf32>
    tpu.vector_store %arg8[%c0_55, %c0_56, %c0_57], %95 {strides = array<i32>} : memref<1x64x128xf32, #tpu.memory_space<vmem>>, vector<1x64x128xf32>,
    return
  }
  func.func @transform_0(%arg0: i32, %arg1: i32) -> (i32, i32, i32) {
    %c0_i32 = arith.constant 0 : i32
    %c0_i32_0 = arith.constant 0 : i32
    return %arg0, %arg1, %c0_i32 : i32, i32, i32
  }
  func.func @transform_1(%arg0: i32, %arg1: i32) -> (i32, i32) {
    %c0_i32 = arith.constant 0 : i32
    %c0_i32_0 = arith.constant 0 : i32
    %c0_i32_1 = arith.constant 0 : i32
    return %c0_i32, %c0_i32_0 : i32, i32
  }
  func.func @transform_2(%arg0: i32, %arg1: i32) -> (i32, i32) {
    %c0_i32 = arith.constant 0 : i32
    %c0_i32_0 = arith.constant 0 : i32
    %c0_i32_1 = arith.constant 0 : i32
    return %c0_i32, %c0_i32_0 : i32, i32
  }
  func.func @transform_3(%arg0: i32, %arg1: i32) -> (i32, i32) {
    %c0_i32 = arith.constant 0 : i32
    %c0_i32_0 = arith.constant 0 : i32
    %c0_i32_1 = arith.constant 0 : i32
    return %c0_i32, %c0_i32_0 : i32, i32
  }
  func.func @transform_4(%arg0: i32, %arg1: i32) -> (i32, i32) {
    %c0_i32 = arith.constant 0 : i32
    %c0_i32_0 = arith.constant 0 : i32
    %c0_i32_1 = arith.constant 0 : i32
    return %c0_i32, %c0_i32_0 : i32, i32
  }
  func.func @transform_5(%arg0: i32, %arg1: i32) -> (i32, i32) {
    %c0_i32 = arith.constant 0 : i32
    %c0_i32_0 = arith.constant 0 : i32
    %c0_i32_1 = arith.constant 0 : i32
    return %c0_i32, %c0_i32_0 : i32, i32
  }
  func.func @transform_6(%arg0: i32, %arg1: i32) -> (i32, i32, i32) {
    %c0_i32 = arith.constant 0 : i32
    %c0_i32_0 = arith.constant 0 : i32
    return %arg0, %arg1, %c0_i32 : i32, i32, i32
  }
}

</mosaic_0001>

<llo_original>
// kernel: _rnn_forward_impl.1
$region0: #{_rnn_forward_impl.1}
  #allocation0 [shape = 'u32[]', space=smem, size = 0x4, offset = 0x4, fixed_abs, tag = 'smem constant byte address 0x4 - core index']
  #allocation1 [shape = 'u32[144,128]{1,0:T(1,128)}', space=vmem, size = 0x12000, scoped, tag = 'internal scratch']
  #allocation2 [shape = 'f32[8,128]{1,0:T(8,128)}', space=vmem, size = 0x1000, scoped, tag = 'scratch operand']
  #allocation3 [shape = 'f32[64,128]{1,0:T(8,128)}', space=vmem, size = 0x8000, scoped, tag = 'scratch operand']
  %s0 = inlined_call_operand.vmem [shape: bf16[1,64,32], index: 0, kind: input, shape index: {}]
  %s1 = inlined_call_operand.vmem [shape: bf16[32,128], index: 1, kind: input, shape index: {}]
  %s2 = inlined_call_operand.vmem [shape: f32[128,128], index: 2, kind: input, shape index: {}]
  %s3 = inlined_call_operand.vmem [shape: f32[1,128], index: 3, kind: input, shape index: {}]
  %s4 = inlined_call_operand.vmem [shape: bf16[128,128], index: 4, kind: input, shape index: {}]
  %s5 = inlined_call_operand.vmem [shape: f32[1,128], index: 5, kind: input, shape index: {}]
  %s6 = inlined_call_operand.hbm [shape: f32[1,64,128], index: 6, kind: output, shape index: {}]
  %s7 = sld [smem:[#allocation0]]
  $region38: #{_rnn_forward_impl.1} parent=0
    _
  %s9 = ssub.s32 1, %s7
  %s10 = scalar_select 0, %s9, %s7
  $region1: #{_rnn_forward_impl.1} parent=0
    #allocation4 [shape = 'u8[32768]{0}', space=vmem, size = 0x8000, scoped, tag = 'output window, operand 0, single buffered']
    #allocation5 [shape = 's32[1]{0}', space=sflag, size = 0x4, scoped, tag = 'scoped memory for _rnn_forward_impl.1']
    %11 = vsyncpa [#allocation5], 0
    // Predicated region
    $region2: #{_rnn_forward_impl.1} parent=1 // pred_check
      _
    $region3: #{_rnn_forward_impl.1} parent=1 // pred_check_branch
      %13 = sbr.rel (0) target = $region5
    $region4: #{_rnn_forward_impl.1} parent=1 // pred_region
      _
    $region5: #{_rnn_forward_impl.1} parent=1 // pred_fallthru
      _
    // Predicated region
    $region6: #{_rnn_forward_impl.1} parent=1 // pred_check
      _
    $region7: #{_rnn_forward_impl.1} parent=1 // pred_check_branch
      %15 = sbr.rel (0) target = $region9
    $region8: #{_rnn_forward_impl.1} parent=1 // pred_region
      _
    $region9: #{_rnn_forward_impl.1} parent=1 // pred_fallthru
      _
    // Predicated region
    $region10: #{_rnn_forward_impl.1} parent=1 // pred_check
      _
    $region11: #{_rnn_forward_impl.1} parent=1 // pred_check_branch
      %17 = sbr.rel (0) target = $region13
    $region12: #{_rnn_forward_impl.1} parent=1 // pred_region
      _
    $region13: #{_rnn_forward_impl.1} parent=1 // pred_fallthru
      _
    // Predicated region
    $region14: #{_rnn_forward_impl.1} parent=1 // pred_check
      _
    $region15: #{_rnn_forward_impl.1} parent=1 // pred_check_branch
      %19 = sbr.rel (0) target = $region17
    $region16: #{_rnn_forward_impl.1} parent=1 // pred_region
      _
    $region17: #{_rnn_forward_impl.1} parent=1 // pred_fallthru
      _
    // Predicated region
    $region18: #{_rnn_forward_impl.1} parent=1 // pred_check
      _
    $region19: #{_rnn_forward_impl.1} parent=1 // pred_check_branch
      %21 = sbr.rel (0) target = $region21
    $region20: #{_rnn_forward_impl.1} parent=1 // pred_region
      _
    $region21: #{_rnn_forward_impl.1} parent=1 // pred_fallthru
      _
    // Predicated region
    $region22: #{_rnn_forward_impl.1} parent=1 // pred_check
      _
    $region23: #{_rnn_forward_impl.1} parent=1 // pred_check_branch
      %23 = sbr.rel (0) target = $region25
    $region24: #{_rnn_forward_impl.1} parent=1 // pred_region
      _
    $region25: #{_rnn_forward_impl.1} parent=1 // pred_fallthru
      _
    %p25 = scmp.eq.s32.totalorder 0, 0
    // Predicated region
    $region26: #{_rnn_forward_impl.1} parent=1 // pred_check
      %p26 = pneg %p25
    $region27: #{_rnn_forward_impl.1} parent=1 // pred_check_branch
      %28 = sbr.rel (%p26) target = $region29
    $region28: #{_rnn_forward_impl.1} parent=1 // pred_region
      %29 = vst [vmem:[#allocation2] sm:$0xff] 0.0
    $region29: #{_rnn_forward_impl.1} parent=1 // pred_fallthru
      _
    %v30 = vld [vmem:[%s0] sm:$0xf]
    %v31 = vld [vmem:[%s0 + $0x4] sm:$0xf]
    %v32 = vld [vmem:[%s0 + $0x8] sm:$0xf]
    %v33 = vld [vmem:[%s0 + $0xc] sm:$0xf]
    %v34 = vld [vmem:[%s0 + $0x10] sm:$0xf]
    %v35 = vld [vmem:[%s0 + $0x14] sm:$0xf]
    %v36 = vld [vmem:[%s0 + $0x18] sm:$0xf]
    %v37 = vld [vmem:[%s0 + $0x1c] sm:$0xf]
    %v38 = vld [vmem:[%s1] sm:$0xf]
    %v39 = vld [vmem:[%s1 + $0x4] sm:$0xf]
    %v40 = vld [vmem:[%s1 + $0x8] sm:$0xf]
    %v41 = vld [vmem:[%s1 + $0xc] sm:$0xf]
    %v42 = vld [vmem:[%s3] sm:$0x1]
    %v44 = vlaneseq
    %v45 = vshrl.u32 %v44, 7
    %v46 = vsub.s32 0, %v45
    %v47 = vrot.slane %v42, %v46
    %v57 = vunpack.c.l.b16 %v30
    %v58 = vunpack.c.l.b16 %v31
    %v59 = vunpack.c.l.b16 %v32
    %v60 = vunpack.c.l.b16 %v33
    %v61 = vunpack.c.l.b16 %v34
    %v62 = vunpack.c.l.b16 %v35
    %v63 = vunpack.c.l.b16 %v36
    %v64 = vunpack.c.l.b16 %v37
    %v65 = vpack.c.b16 %v58, %v57
    %v66 = vpack.c.b16 %v60, %v59
    %v67 = vpack.c.b16 %v62, %v61
    %v68 = vpack.c.b16 %v64, %v63
    %v73 = vunpack.c.l.b16 %v38
    %v74 = vunpack.c.l.b16 %v39
    %v75 = vunpack.c.l.b16 %v40
    %v76 = vunpack.c.l.b16 %v41
    %v77 = vpack.c.b16 %v74, %v73
    %v78 = vpack.c.b16 %v76, %v75
    %vm81 = vcmask 261120
    %v83 = vsel %vm81, %v65, 0
    %v86 = vsel %vm81, %v66, 0
    %v89 = vsel %vm81, %v67, 0
    %v92 = vsel %vm81, %v68, 0
    %94 = vmatprep.subr.bf16.mxu0 0
    %95 = vmatpush1.bf16.msra.mxu0 0
    %96 = vmatprep.subr.bf16.mxu0 0
    %97 = vmatpush1.bf16.msra.mxu0 0
    %98 = vmatprep.subr.bf16.mxu0 0
    %99 = vmatpush1.bf16.msra.mxu0 0
    %100 = vmatprep.subr.bf16.mxu0 0
    %101 = vmatpush1.bf16.msra.mxu0 0
    %102 = vmatprep.subr.bf16.mxu0 0
    %103 = vmatpush1.bf16.msra.mxu0 0
    %104 = vmatprep.subr.bf16.mxu0 0
    %105 = vmatpush1.bf16.msra.mxu0 0
    %106 = vmatprep.subr.bf16.mxu0 0
    %107 = vmatpush1.bf16.msra.mxu0 %v78
    %108 = vmatprep.subr.bf16.mxu0 0
    %109 = vmatpush1.bf16.msra.mxu0 %v77
    %110 = vmatprep.subr.bf16.mxu0 0
    %111 = vmatpush2.bf16.msra.mxu0 0
    %112 = vmatprep.subr.bf16.mxu0 0
    %113 = vmatpush2.bf16.msra.mxu0 0
    %114 = vmatprep.subr.bf16.mxu0 0
    %115 = vmatpush2.bf16.msra.mxu0 0
    %116 = vmatprep.subr.bf16.mxu0 0
    %117 = vmatpush2.bf16.msra.mxu0 0
    %118 = vmatprep.subr.bf16.mxu0 0
    %119 = vmatpush2.bf16.msra.mxu0 0
    %120 = vmatprep.subr.bf16.mxu0 0
    %121 = vmatpush2.bf16.msra.mxu0 0
    %122 = vmatprep.subr.bf16.mxu0 0
    %123 = vmatpush2.bf16.msra.mxu0 0
    %124 = vmatprep.subr.bf16.mxu0 0
    %125 = vmatpush2.bf16.msra.mxu0 0
    %126 = vmatprep.mubr.bf16.mxu0 0
    %127 = vmatmul.mubr.bf16.gmra.mxu0 %v83
    %v128 = vpop.f32.mrf.mxu0
    %v129 = vadd.f32 %v47, %v128
    %v130 = vpop.f32.mrf.mxu0
    %v131 = vpop.f32.mrf.mxu0
    %v132 = vadd.f32 %v47, %v131
    %v133 = vpop.f32.mrf.mxu0
    %134 = vmatprep.mubr.bf16.mxu0 0
    %135 = vmatmul.mubr.bf16.gmra.mxu0 %v86
    %v136 = vpop.f32.mrf.mxu0
    %v137 = vadd.f32 %v47, %v136
    %v138 = vpop.f32.mrf.mxu0
    %v139 = vpop.f32.mrf.mxu0
    %v140 = vadd.f32 %v47, %v139
    %v141 = vpop.f32.mrf.mxu0
    %142 = vmatprep.mubr.bf16.mxu0 0
    %143 = vmatmul.mubr.bf16.gmra.mxu0 %v89
    %v144 = vpop.f32.mrf.mxu0
    %v145 = vadd.f32 %v47, %v144
    %v146 = vpop.f32.mrf.mxu0
    %v147 = vpop.f32.mrf.mxu0
    %v148 = vadd.f32 %v47, %v147
    %v149 = vpop.f32.mrf.mxu0
    %150 = vmatprep.mubr.bf16.mxu0 0
    %151 = vmatmul.mubr.bf16.gmra.mxu0 %v92
    %v152 = vpop.f32.mrf.mxu0
    %v153 = vadd.f32 %v47, %v152
    %v154 = vpop.f32.mrf.mxu0
    %v155 = vpop.f32.mrf.mxu0
    %v156 = vadd.f32 %v47, %v155
    %v157 = vpop.f32.mrf.mxu0
    %158 = vdwg.mxu0
    %159 = vst [vmem:[#allocation3] sm:$0xff] %v129
    %160 = vst [vmem:[#allocation3 + $0x8] sm:$0xff] %v132
    %161 = vst [vmem:[#allocation3 + $0x10] sm:$0xff] %v137
    %162 = vst [vmem:[#allocation3 + $0x18] sm:$0xff] %v140
    %163 = vst [vmem:[#allocation3 + $0x20] sm:$0xff] %v145
    %164 = vst [vmem:[#allocation3 + $0x28] sm:$0xff] %v148
    %165 = vst [vmem:[#allocation3 + $0x30] sm:$0xff] %v153
    %166 = vst [vmem:[#allocation3 + $0x38] sm:$0xff] %v156
    %v167 = vld [vmem:[%s2] sm:$0xff]
    %v168 = vld [vmem:[%s2 + $0x8] sm:$0xff]
    %v169 = vld [vmem:[%s2 + $0x10] sm:$0xff]
    %v170 = vld [vmem:[%s2 + $0x18] sm:$0xff]
    %v171 = vld [vmem:[%s2 + $0x20] sm:$0xff]
    %v172 = vld [vmem:[%s2 + $0x28] sm:$0xff]
    %v173 = vld [vmem:[%s2 + $0x30] sm:$0xff]
    %v174 = vld [vmem:[%s2 + $0x38] sm:$0xff]
    %v175 = vld [vmem:[%s2 + $0x40] sm:$0xff]
    %v176 = vld [vmem:[%s2 + $0x48] sm:$0xff]
    %v177 = vld [vmem:[%s2 + $0x50] sm:$0xff]
    %v178 = vld [vmem:[%s2 + $0x58] sm:$0xff]
    %v179 = vld [vmem:[%s2 + $0x60] sm:$0xff]
    %v180 = vld [vmem:[%s2 + $0x68] sm:$0xff]
    %v181 = vld [vmem:[%s2 + $0x70] sm:$0xff]
    %v182 = vld [vmem:[%s2 + $0x78] sm:$0xff]
    %v183 = vld [vmem:[#allocation2] sm:$0xff]
    %v184 = vld [vmem:[#allocation3] sm:$0xff]
    %185 = vmatprep.subr.mxu0 0.0
    %186 = vmatpush1.msra.mxu0 %v182
    %187 = vmatprep.subr.mxu0 0.0
    %188 = vmatpush1.msra.mxu0 %v181
    %189 = vmatprep.subr.mxu0 0.0
    %190 = vmatpush1.msra.mxu0 %v180
    %191 = vmatprep.subr.mxu0 0.0
    %192 = vmatpush1.msra.mxu0 %v179
    %193 = vmatprep.subr.mxu0 0.0
    %194 = vmatpush1.msra.mxu0 %v178
    %195 = vmatprep.subr.mxu0 0.0
    %196 = vmatpush1.msra.mxu0 %v177
    %197 = vmatprep.subr.mxu0 0.0
    %198 = vmatpush1.msra.mxu0 %v176
    %199 = vmatprep.subr.mxu0 0.0
    %200 = vmatpush1.msra.mxu0 %v175
    %201 = vmatprep.subr.mxu0 0.0
    %202 = vmatpush1.msra.mxu0 %v174
    %203 = vmatprep.subr.mxu0 0.0
    %204 = vmatpush1.msra.mxu0 %v173
    %205 = vmatprep.subr.mxu0 0.0
    %206 = vmatpush1.msra.mxu0 %v172
    %207 = vmatprep.subr.mxu0 0.0
    %208 = vmatpush1.msra.mxu0 %v171
    %209 = vmatprep.subr.mxu0 0.0
    %210 = vmatpush1.msra.mxu0 %v170
    %211 = vmatprep.subr.mxu0 0.0
    %212 = vmatpush1.msra.mxu0 %v169
    %213 = vmatprep.subr.mxu0 0.0
    %214 = vmatpush1.msra.mxu0 %v168
    %215 = vmatprep.subr.mxu0 0.0
    %216 = vmatpush1.msra.mxu0 %v167
    %217 = vmatprep.subr.mxu0 0.0
    %218 = vmatpush2.msra.mxu0 0.0
    %219 = vmatprep.subr.mxu0 0.0
    %220 = vmatpush2.msra.mxu0 0.0
    %221 = vmatprep.subr.mxu0 0.0
    %222 = vmatpush2.msra.mxu0 0.0
    %223 = vmatprep.subr.mxu0 0.0
    %224 = vmatpush2.msra.mxu0 0.0
    %225 = vmatprep.subr.mxu0 0.0
    %226 = vmatpush2.msra.mxu0 0.0
    %227 = vmatprep.subr.mxu0 0.0
    %228 = vmatpush2.msra.mxu0 0.0
    %229 = vmatprep.subr.mxu0 0.0
    %230 = vmatpush2.msra.mxu0 0.0
    %231 = vmatprep.subr.mxu0 0.0
    %232 = vmatpush2.msra.mxu0 0.0
    %233 = vmatprep.subr.mxu0 0.0
    %234 = vmatpush2.msra.mxu0 0.0
    %235 = vmatprep.subr.mxu0 0.0
    %236 = vmatpush2.msra.mxu0 0.0
    %237 = vmatprep.subr.mxu0 0.0
    %238 = vmatpush2.msra.mxu0 0.0
    %239 = vmatprep.subr.mxu0 0.0
    %240 = vmatpush2.msra.mxu0 0.0
    %241 = vmatprep.subr.mxu0 0.0
    %242 = vmatpush2.msra.mxu0 0.0
    %243 = vmatprep.subr.mxu0 0.0
    %244 = vmatpush2.msra.mxu0 0.0
    %245 = vmatprep.subr.mxu0 0.0
    %246 = vmatpush2.msra.mxu0 0.0
    %247 = vmatprep.subr.mxu0 0.0
    %248 = vmatpush2.msra.mxu0 0.0
    %249 = vmatprep.mubr.f32.mxu0 0.0
    %250 = vmatmul.mubr.f32.gmra.mxu0 %v183
    %v251 = vpop.f32.mrf.mxu0
    %v252 = vadd.f32 0.0, %v251
    %v253 = vpop.f32.mrf.mxu0
    %254 = vdwg.mxu0
    %v255 = vadd.f32 %v184, %v252
    %v256 = vtanh.pop %v255
    %257 = vst [vmem:[#allocation3] sm:$0xff] %v256
    %s258 = scalar_lea.vmem [#allocation3], 8
    %v259 = vld [vmem:[%s258] sm:$0xff]
    %260 = vmatprep.subr.mxu0 0.0
    %261 = vmatpush1.msra.mxu0 %v182
    %262 = vmatprep.subr.mxu0 0.0
    %263 = vmatpush1.msra.mxu0 %v181
    %264 = vmatprep.subr.mxu0 0.0
    %265 = vmatpush1.msra.mxu0 %v180
    %266 = vmatprep.subr.mxu0 0.0
    %267 = vmatpush1.msra.mxu0 %v179
    %268 = vmatprep.subr.mxu0 0.0
    %269 = vmatpush1.msra.mxu0 %v178
    %270 = vmatprep.subr.mxu0 0.0
    %271 = vmatpush1.msra.mxu0 %v177
    %272 = vmatprep.subr.mxu0 0.0
    %273 = vmatpush1.msra.mxu0 %v176
    %274 = vmatprep.subr.mxu0 0.0
    %275 = vmatpush1.msra.mxu0 %v175
    %276 = vmatprep.subr.mxu0 0.0
    %277 = vmatpush1.msra.mxu0 %v174
    %278 = vmatprep.subr.mxu0 0.0
    %279 = vmatpush1.msra.mxu0 %v173
    %280 = vmatprep.subr.mxu0 0.0
    %281 = vmatpush1.msra.mxu0 %v172
    %282 = vmatprep.subr.mxu0 0.0
    %283 = vmatpush1.msra.mxu0 %v171
    %284 = vmatprep.subr.mxu0 0.0
    %285 = vmatpush1.msra.mxu0 %v170
    %286 = vmatprep.subr.mxu0 0.0
    %287 = vmatpush1.msra.mxu0 %v169
    %288 = vmatprep.subr.mxu0 0.0
    %289 = vmatpush1.msra.mxu0 %v168
    %290 = vmatprep.subr.mxu0 0.0
    %291 = vmatpush1.msra.mxu0 %v167
    %292 = vmatprep.subr.mxu0 0.0
    %293 = vmatpush2.msra.mxu0 0.0
    %294 = vmatprep.subr.mxu0 0.0
    %295 = vmatpush2.msra.mxu0 0.0
    %296 = vmatprep.subr.mxu0 0.0
    %297 = vmatpush2.msra.mxu0 0.0
    %298 = vmatprep.subr.mxu0 0.0
    %299 = vmatpush2.msra.mxu0 0.0
    %300 = vmatprep.subr.mxu0 0.0
    %301 = vmatpush2.msra.mxu0 0.0
    %302 = vmatprep.subr.mxu0 0.0
    %303 = vmatpush2.msra.mxu0 0.0
    %304 = vmatprep.subr.mxu0 0.0
    %305 = vmatpush2.msra.mxu0 0.0
    %306 = vmatprep.subr.mxu0 0.0
    %307 = vmatpush2.msra.mxu0 0.0
    %308 = vmatprep.subr.mxu0 0.0
    %309 = vmatpush2.msra.mxu0 0.0
    %310 = vmatprep.subr.mxu0 0.0
    %311 = vmatpush2.msra.mxu0 0.0
    %312 = vmatprep.subr.mxu0 0.0
    %313 = vmatpush2.msra.mxu0 0.0
    %314 = vmatprep.subr.mxu0 0.0
    %315 = vmatpush2.msra.mxu0 0.0
    %316 = vmatprep.subr.mxu0 0.0
    %317 = vmatpush2.msra.mxu0 0.0
    %318 = vmatprep.subr.mxu0 0.0
    %319 = vmatpush2.msra.mxu0 0.0
    %320 = vmatprep.subr.mxu0 0.0
    %321 = vmatpush2.msra.mxu0 0.0
    %322 = vmatprep.subr.mxu0 0.0
    %323 = vmatpush2.msra.mxu0 0.0
    %324 = vmatprep.mubr.f32.mxu0 0.0
    %325 = vmatmul.mubr.f32.gmra.mxu0 %v256
    %v326 = vpop.f32.mrf.mxu0
    %v327 = vadd.f32 0.0, %v326
    %v328 = vpop.f32.mrf.mxu0
    %329 = vdwg.mxu0
    %v330 = vadd.f32 %v259, %v327
    %v331 = vtanh.pop %v330
    %332 = vst [vmem:[%s258] sm:$0xff] %v331
    %s333 = scalar_lea.vmem [#allocation3], 16
    %v334 = vld [vmem:[%s333] sm:$0xff]
    %335 = vmatprep.subr.mxu0 0.0
    %336 = vmatpush1.msra.mxu0 %v182
    %337 = vmatprep.subr.mxu0 0.0
    %338 = vmatpush1.msra.mxu0 %v181
    %339 = vmatprep.subr.mxu0 0.0
    %340 = vmatpush1.msra.mxu0 %v180
    %341 = vmatprep.subr.mxu0 0.0
    %342 = vmatpush1.msra.mxu0 %v179
    %343 = vmatprep.subr.mxu0 0.0
    %344 = vmatpush1.msra.mxu0 %v178
    %345 = vmatprep.subr.mxu0 0.0
    %346 = vmatpush1.msra.mxu0 %v177
    %347 = vmatprep.subr.mxu0 0.0
    %348 = vmatpush1.msra.mxu0 %v176
    %349 = vmatprep.subr.mxu0 0.0
    %350 = vmatpush1.msra.mxu0 %v175
    %351 = vmatprep.subr.mxu0 0.0
    %352 = vmatpush1.msra.mxu0 %v174
    %353 = vmatprep.subr.mxu0 0.0
    %354 = vmatpush1.msra.mxu0 %v173
    %355 = vmatprep.subr.mxu0 0.0
    %356 = vmatpush1.msra.mxu0 %v172
    %357 = vmatprep.subr.mxu0 0.0
    %358 = vmatpush1.msra.mxu0 %v171
    %359 = vmatprep.subr.mxu0 0.0
    %360 = vmatpush1.msra.mxu0 %v170
    %361 = vmatprep.subr.mxu0 0.0
    %362 = vmatpush1.msra.mxu0 %v169
    %363 = vmatprep.subr.mxu0 0.0
    %364 = vmatpush1.msra.mxu0 %v168
    %365 = vmatprep.subr.mxu0 0.0
    %366 = vmatpush1.msra.mxu0 %v167
    %367 = vmatprep.subr.mxu0 0.0
    %368 = vmatpush2.msra.mxu0 0.0
    %369 = vmatprep.subr.mxu0 0.0
    %370 = vmatpush2.msra.mxu0 0.0
    %371 = vmatprep.subr.mxu0 0.0
    %372 = vmatpush2.msra.mxu0 0.0
    %373 = vmatprep.subr.mxu0 0.0
    %374 = vmatpush2.msra.mxu0 0.0
    %375 = vmatprep.subr.mxu0 0.0
    %376 = vmatpush2.msra.mxu0 0.0
    %377 = vmatprep.subr.mxu0 0.0
    %378 = vmatpush2.msra.mxu0 0.0
    %379 = vmatprep.subr.mxu0 0.0
    %380 = vmatpush2.msra.mxu0 0.0
    %381 = vmatprep.subr.mxu0 0.0
    %382 = vmatpush2.msra.mxu0 0.0
    %383 = vmatprep.subr.mxu0 0.0
    %384 = vmatpush2.msra.mxu0 0.0
    %385 = vmatprep.subr.mxu0 0.0
    %386 = vmatpush2.msra.mxu0 0.0
    %387 = vmatprep.subr.mxu0 0.0
    %388 = vmatpush2.msra.mxu0 0.0
    %389 = vmatprep.subr.mxu0 0.0
    %390 = vmatpush2.msra.mxu0 0.0
    %391 = vmatprep.subr.mxu0 0.0
    %392 = vmatpush2.msra.mxu0 0.0
    %393 = vmatprep.subr.mxu0 0.0
    %394 = vmatpush2.msra.mxu0 0.0
    %395 = vmatprep.subr.mxu0 0.0
    %396 = vmatpush2.msra.mxu0 0.0
    %397 = vmatprep.subr.mxu0 0.0
    %398 = vmatpush2.msra.mxu0 0.0
    %399 = vmatprep.mubr.f32.mxu0 0.0
    %400 = vmatmul.mubr.f32.gmra.mxu0 %v331
    %v401 = vpop.f32.mrf.mxu0
    %v402 = vadd.f32 0.0, %v401
    %v403 = vpop.f32.mrf.mxu0
    %404 = vdwg.mxu0
    %v405 = vadd.f32 %v334, %v402
    %v406 = vtanh.pop %v405
    %407 = vst [vmem:[%s333] sm:$0xff] %v406
    %s408 = scalar_lea.vmem [#allocation3], 24
    %v409 = vld [vmem:[%s408] sm:$0xff]
    %410 = vmatprep.subr.mxu0 0.0
    %411 = vmatpush1.msra.mxu0 %v182
    %412 = vmatprep.subr.mxu0 0.0
    %413 = vmatpush1.msra.mxu0 %v181
    %414 = vmatprep.subr.mxu0 0.0
    %415 = vmatpush1.msra.mxu0 %v180
    %416 = vmatprep.subr.mxu0 0.0
    %417 = vmatpush1.msra.mxu0 %v179
    %418 = vmatprep.subr.mxu0 0.0
    %419 = vmatpush1.msra.mxu0 %v178
    %420 = vmatprep.subr.mxu0 0.0
    %421 = vmatpush1.msra.mxu0 %v177
    %422 = vmatprep.subr.mxu0 0.0
    %423 = vmatpush1.msra.mxu0 %v176
    %424 = vmatprep.subr.mxu0 0.0
    %425 = vmatpush1.msra.mxu0 %v175
    %426 = vmatprep.subr.mxu0 0.0
    %427 = vmatpush1.msra.mxu0 %v174
    %428 = vmatprep.subr.mxu0 0.0
    %429 = vmatpush1.msra.mxu0 %v173
    %430 = vmatprep.subr.mxu0 0.0
    %431 = vmatpush1.msra.mxu0 %v172
    %432 = vmatprep.subr.mxu0 0.0
    %433 = vmatpush1.msra.mxu0 %v171
    %434 = vmatprep.subr.mxu0 0.0
    %435 = vmatpush1.msra.mxu0 %v170
    %436 = vmatprep.subr.mxu0 0.0
    %437 = vmatpush1.msra.mxu0 %v169
    %438 = vmatprep.subr.mxu0 0.0
    %439 = vmatpush1.msra.mxu0 %v168
    %440 = vmatprep.subr.mxu0 0.0
    %441 = vmatpush1.msra.mxu0 %v167
    %442 = vmatprep.subr.mxu0 0.0
    %443 = vmatpush2.msra.mxu0 0.0
    %444 = vmatprep.subr.mxu0 0.0
    %445 = vmatpush2.msra.mxu0 0.0
    %446 = vmatprep.subr.mxu0 0.0
    %447 = vmatpush2.msra.mxu0 0.0
    %448 = vmatprep.subr.mxu0 0.0
    %449 = vmatpush2.msra.mxu0 0.0
    %450 = vmatprep.subr.mxu0 0.0
    %451 = vmatpush2.msra.mxu0 0.0
    %452 = vmatprep.subr.mxu0 0.0
    %453 = vmatpush2.msra.mxu0 0.0
    %454 = vmatprep.subr.mxu0 0.0
    %455 = vmatpush2.msra.mxu0 0.0
    %456 = vmatprep.subr.mxu0 0.0
    %457 = vmatpush2.msra.mxu0 0.0
    %458 = vmatprep.subr.mxu0 0.0
    %459 = vmatpush2.msra.mxu0 0.0
    %460 = vmatprep.subr.mxu0 0.0
    %461 = vmatpush2.msra.mxu0 0.0
    %462 = vmatprep.subr.mxu0 0.0
    %463 = vmatpush2.msra.mxu0 0.0
    %464 = vmatprep.subr.mxu0 0.0
    %465 = vmatpush2.msra.mxu0 0.0
    %466 = vmatprep.subr.mxu0 0.0
    %467 = vmatpush2.msra.mxu0 0.0
    %468 = vmatprep.subr.mxu0 0.0
    %469 = vmatpush2.msra.mxu0 0.0
    %470 = vmatprep.subr.mxu0 0.0
    %471 = vmatpush2.msra.mxu0 0.0
    %472 = vmatprep.subr.mxu0 0.0
    %473 = vmatpush2.msra.mxu0 0.0
    %474 = vmatprep.mubr.f32.mxu0 0.0
    %475 = vmatmul.mubr.f32.gmra.mxu0 %v406
    %v476 = vpop.f32.mrf.mxu0
    %v477 = vadd.f32 0.0, %v476
    %v478 = vpop.f32.mrf.mxu0
    %479 = vdwg.mxu0
    %v480 = vadd.f32 %v409, %v477
    %v481 = vtanh.pop %v480
    %482 = vst [vmem:[%s408] sm:$0xff] %v481
    %s483 = scalar_lea.vmem [#allocation3], 32
    %v484 = vld [vmem:[%s483] sm:$0xff]
    %485 = vmatprep.subr.mxu0 0.0
    %486 = vmatpush1.msra.mxu0 %v182
    %487 = vmatprep.subr.mxu0 0.0
    %488 = vmatpush1.msra.mxu0 %v181
    %489 = vmatprep.subr.mxu0 0.0
    %490 = vmatpush1.msra.mxu0 %v180
    %491 = vmatprep.subr.mxu0 0.0
    %492 = vmatpush1.msra.mxu0 %v179
    %493 = vmatprep.subr.mxu0 0.0
    %494 = vmatpush1.msra.mxu0 %v178
    %495 = vmatprep.subr.mxu0 0.0
    %496 = vmatpush1.msra.mxu0 %v177
    %497 = vmatprep.subr.mxu0 0.0
    %498 = vmatpush1.msra.mxu0 %v176
    %499 = vmatprep.subr.mxu0 0.0
    %500 = vmatpush1.msra.mxu0 %v175
    %501 = vmatprep.subr.mxu0 0.0
    %502 = vmatpush1.msra.mxu0 %v174
    %503 = vmatprep.subr.mxu0 0.0
    %504 = vmatpush1.msra.mxu0 %v173
    %505 = vmatprep.subr.mxu0 0.0
    %506 = vmatpush1.msra.mxu0 %v172
    %507 = vmatprep.subr.mxu0 0.0
    %508 = vmatpush1.msra.mxu0 %v171
    %509 = vmatprep.subr.mxu0 0.0
    %510 = vmatpush1.msra.mxu0 %v170
    %511 = vmatprep.subr.mxu0 0.0
    %512 = vmatpush1.msra.mxu0 %v169
    %513 = vmatprep.subr.mxu0 0.0
    %514 = vmatpush1.msra.mxu0 %v168
    %515 = vmatprep.subr.mxu0 0.0
    %516 = vmatpush1.msra.mxu0 %v167
    %517 = vmatprep.subr.mxu0 0.0
    %518 = vmatpush2.msra.mxu0 0.0
    %519 = vmatprep.subr.mxu0 0.0
    %520 = vmatpush2.msra.mxu0 0.0
    %521 = vmatprep.subr.mxu0 0.0
    %522 = vmatpush2.msra.mxu0 0.0
    %523 = vmatprep.subr.mxu0 0.0
    %524 = vmatpush2.msra.mxu0 0.0
    %525 = vmatprep.subr.mxu0 0.0
    %526 = vmatpush2.msra.mxu0 0.0
    %527 = vmatprep.subr.mxu0 0.0
    %528 = vmatpush2.msra.mxu0 0.0
    %529 = vmatprep.subr.mxu0 0.0
    %530 = vmatpush2.msra.mxu0 0.0
    %531 = vmatprep.subr.mxu0 0.0
    %532 = vmatpush2.msra.mxu0 0.0
    %533 = vmatprep.subr.mxu0 0.0
    %534 = vmatpush2.msra.mxu0 0.0
    %535 = vmatprep.subr.mxu0 0.0
    %536 = vmatpush2.msra.mxu0 0.0
    %537 = vmatprep.subr.mxu0 0.0
    %538 = vmatpush2.msra.mxu0 0.0
    %539 = vmatprep.subr.mxu0 0.0
    %540 = vmatpush2.msra.mxu0 0.0
    %541 = vmatprep.subr.mxu0 0.0
    %542 = vmatpush2.msra.mxu0 0.0
    %543 = vmatprep.subr.mxu0 0.0
    %544 = vmatpush2.msra.mxu0 0.0
    %545 = vmatprep.subr.mxu0 0.0
    %546 = vmatpush2.msra.mxu0 0.0
    %547 = vmatprep.subr.mxu0 0.0
    %548 = vmatpush2.msra.mxu0 0.0
    %549 = vmatprep.mubr.f32.mxu0 0.0
    %550 = vmatmul.mubr.f32.gmra.mxu0 %v481
    %v551 = vpop.f32.mrf.mxu0
    %v552 = vadd.f32 0.0, %v551
    %v553 = vpop.f32.mrf.mxu0
    %554 = vdwg.mxu0
    %v555 = vadd.f32 %v484, %v552
    %v556 = vtanh.pop %v555
    %557 = vst [vmem:[%s483] sm:$0xff] %v556
    %s558 = scalar_lea.vmem [#allocation3], 40
    %v559 = vld [vmem:[%s558] sm:$0xff]
    %560 = vmatprep.subr.mxu0 0.0
    %561 = vmatpush1.msra.mxu0 %v182
    %562 = vmatprep.subr.mxu0 0.0
    %563 = vmatpush1.msra.mxu0 %v181
    %564 = vmatprep.subr.mxu0 0.0
    %565 = vmatpush1.msra.mxu0 %v180
    %566 = vmatprep.subr.mxu0 0.0
    %567 = vmatpush1.msra.mxu0 %v179
    %568 = vmatprep.subr.mxu0 0.0
    %569 = vmatpush1.msra.mxu0 %v178
    %570 = vmatprep.subr.mxu0 0.0
    %571 = vmatpush1.msra.mxu0 %v177
    %572 = vmatprep.subr.mxu0 0.0
    %573 = vmatpush1.msra.mxu0 %v176
    %574 = vmatprep.subr.mxu0 0.0
    %575 = vmatpush1.msra.mxu0 %v175
    %576 = vmatprep.subr.mxu0 0.0
    %577 = vmatpush1.msra.mxu0 %v174
    %578 = vmatprep.subr.mxu0 0.0
    %579 = vmatpush1.msra.mxu0 %v173
    %580 = vmatprep.subr.mxu0 0.0
    %581 = vmatpush1.msra.mxu0 %v172
    %582 = vmatprep.subr.mxu0 0.0
    %583 = vmatpush1.msra.mxu0 %v171
    %584 = vmatprep.subr.mxu0 0.0
    %585 = vmatpush1.msra.mxu0 %v170
    %586 = vmatprep.subr.mxu0 0.0
    %587 = vmatpush1.msra.mxu0 %v169
    %588 = vmatprep.subr.mxu0 0.0
    %589 = vmatpush1.msra.mxu0 %v168
    %590 = vmatprep.subr.mxu0 0.0
    %591 = vmatpush1.msra.mxu0 %v167
    %592 = vmatprep.subr.mxu0 0.0
    %593 = vmatpush2.msra.mxu0 0.0
    %594 = vmatprep.subr.mxu0 0.0
    %595 = vmatpush2.msra.mxu0 0.0
    %596 = vmatprep.subr.mxu0 0.0
    %597 = vmatpush2.msra.mxu0 0.0
    %598 = vmatprep.subr.mxu0 0.0
    %599 = vmatpush2.msra.mxu0 0.0
    %600 = vmatprep.subr.mxu0 0.0
    %601 = vmatpush2.msra.mxu0 0.0
    %602 = vmatprep.subr.mxu0 0.0
    %603 = vmatpush2.msra.mxu0 0.0
    %604 = vmatprep.subr.mxu0 0.0
    %605 = vmatpush2.msra.mxu0 0.0
    %606 = vmatprep.subr.mxu0 0.0
    %607 = vmatpush2.msra.mxu0 0.0
    %608 = vmatprep.subr.mxu0 0.0
    %609 = vmatpush2.msra.mxu0 0.0
    %610 = vmatprep.subr.mxu0 0.0
    %611 = vmatpush2.msra.mxu0 0.0
    %612 = vmatprep.subr.mxu0 0.0
    %613 = vmatpush2.msra.mxu0 0.0
    %614 = vmatprep.subr.mxu0 0.0
    %615 = vmatpush2.msra.mxu0 0.0
    %616 = vmatprep.subr.mxu0 0.0
    %617 = vmatpush2.msra.mxu0 0.0
    %618 = vmatprep.subr.mxu0 0.0
    %619 = vmatpush2.msra.mxu0 0.0
    %620 = vmatprep.subr.mxu0 0.0
    %621 = vmatpush2.msra.mxu0 0.0
    %622 = vmatprep.subr.mxu0 0.0
    %623 = vmatpush2.msra.mxu0 0.0
    %624 = vmatprep.mubr.f32.mxu0 0.0
    %625 = vmatmul.mubr.f32.gmra.mxu0 %v556
    %v626 = vpop.f32.mrf.mxu0
    %v627 = vadd.f32 0.0, %v626
    %v628 = vpop.f32.mrf.mxu0
    %629 = vdwg.mxu0
    %v630 = vadd.f32 %v559, %v627
    %v631 = vtanh.pop %v630
    %632 = vst [vmem:[%s558] sm:$0xff] %v631
    %s633 = scalar_lea.vmem [#allocation3], 48
    %v634 = vld [vmem:[%s633] sm:$0xff]
    %635 = vmatprep.subr.mxu0 0.0
    %636 = vmatpush1.msra.mxu0 %v182
    %637 = vmatprep.subr.mxu0 0.0
    %638 = vmatpush1.msra.mxu0 %v181
    %639 = vmatprep.subr.mxu0 0.0
    %640 = vmatpush1.msra.mxu0 %v180
    %641 = vmatprep.subr.mxu0 0.0
    %642 = vmatpush1.msra.mxu0 %v179
    %643 = vmatprep.subr.mxu0 0.0
    %644 = vmatpush1.msra.mxu0 %v178
    %645 = vmatprep.subr.mxu0 0.0
    %646 = vmatpush1.msra.mxu0 %v177
    %647 = vmatprep.subr.mxu0 0.0
    %648 = vmatpush1.msra.mxu0 %v176
    %649 = vmatprep.subr.mxu0 0.0
    %650 = vmatpush1.msra.mxu0 %v175
    %651 = vmatprep.subr.mxu0 0.0
    %652 = vmatpush1.msra.mxu0 %v174
    %653 = vmatprep.subr.mxu0 0.0
    %654 = vmatpush1.msra.mxu0 %v173
    %655 = vmatprep.subr.mxu0 0.0
    %656 = vmatpush1.msra.mxu0 %v172
    %657 = vmatprep.subr.mxu0 0.0
    %658 = vmatpush1.msra.mxu0 %v171
    %659 = vmatprep.subr.mxu0 0.0
    %660 = vmatpush1.msra.mxu0 %v170
    %661 = vmatprep.subr.mxu0 0.0
    %662 = vmatpush1.msra.mxu0 %v169
    %663 = vmatprep.subr.mxu0 0.0
    %664 = vmatpush1.msra.mxu0 %v168
    %665 = vmatprep.subr.mxu0 0.0
    %666 = vmatpush1.msra.mxu0 %v167
    %667 = vmatprep.subr.mxu0 0.0
    %668 = vmatpush2.msra.mxu0 0.0
    %669 = vmatprep.subr.mxu0 0.0
    %670 = vmatpush2.msra.mxu0 0.0
    %671 = vmatprep.subr.mxu0 0.0
    %672 = vmatpush2.msra.mxu0 0.0
    %673 = vmatprep.subr.mxu0 0.0
    %674 = vmatpush2.msra.mxu0 0.0
    %675 = vmatprep.subr.mxu0 0.0
    %676 = vmatpush2.msra.mxu0 0.0
    %677 = vmatprep.subr.mxu0 0.0
    %678 = vmatpush2.msra.mxu0 0.0
    %679 = vmatprep.subr.mxu0 0.0
    %680 = vmatpush2.msra.mxu0 0.0
    %681 = vmatprep.subr.mxu0 0.0
    %682 = vmatpush2.msra.mxu0 0.0
    %683 = vmatprep.subr.mxu0 0.0
    %684 = vmatpush2.msra.mxu0 0.0
    %685 = vmatprep.subr.mxu0 0.0
    %686 = vmatpush2.msra.mxu0 0.0
    %687 = vmatprep.subr.mxu0 0.0
    %688 = vmatpush2.msra.mxu0 0.0
    %689 = vmatprep.subr.mxu0 0.0
    %690 = vmatpush2.msra.mxu0 0.0
    %691 = vmatprep.subr.mxu0 0.0
    %692 = vmatpush2.msra.mxu0 0.0
    %693 = vmatprep.subr.mxu0 0.0
    %694 = vmatpush2.msra.mxu0 0.0
    %695 = vmatprep.subr.mxu0 0.0
    %696 = vmatpush2.msra.mxu0 0.0
    %697 = vmatprep.subr.mxu0 0.0
    %698 = vmatpush2.msra.mxu0 0.0
    %699 = vmatprep.mubr.f32.mxu0 0.0
    %700 = vmatmul.mubr.f32.gmra.mxu0 %v631
    %v701 = vpop.f32.mrf.mxu0
    %v702 = vadd.f32 0.0, %v701
    %v703 = vpop.f32.mrf.mxu0
    %704 = vdwg.mxu0
    %v705 = vadd.f32 %v634, %v702
    %v706 = vtanh.pop %v705
    %707 = vst [vmem:[%s633] sm:$0xff] %v706
    %s708 = scalar_lea.vmem [#allocation3], 56
    %v709 = vld [vmem:[%s708] sm:$0xff]
    %710 = vmatprep.subr.mxu0 0.0
    %711 = vmatpush1.msra.mxu0 %v182
    %712 = vmatprep.subr.mxu0 0.0
    %713 = vmatpush1.msra.mxu0 %v181
    %714 = vmatprep.subr.mxu0 0.0
    %715 = vmatpush1.msra.mxu0 %v180
    %716 = vmatprep.subr.mxu0 0.0
    %717 = vmatpush1.msra.mxu0 %v179
    %718 = vmatprep.subr.mxu0 0.0
    %719 = vmatpush1.msra.mxu0 %v178
    %720 = vmatprep.subr.mxu0 0.0
    %721 = vmatpush1.msra.mxu0 %v177
    %722 = vmatprep.subr.mxu0 0.0
    %723 = vmatpush1.msra.mxu0 %v176
    %724 = vmatprep.subr.mxu0 0.0
    %725 = vmatpush1.msra.mxu0 %v175
    %726 = vmatprep.subr.mxu0 0.0
    %727 = vmatpush1.msra.mxu0 %v174
    %728 = vmatprep.subr.mxu0 0.0
    %729 = vmatpush1.msra.mxu0 %v173
    %730 = vmatprep.subr.mxu0 0.0
    %731 = vmatpush1.msra.mxu0 %v172
    %732 = vmatprep.subr.mxu0 0.0
    %733 = vmatpush1.msra.mxu0 %v171
    %734 = vmatprep.subr.mxu0 0.0
    %735 = vmatpush1.msra.mxu0 %v170
    %736 = vmatprep.subr.mxu0 0.0
    %737 = vmatpush1.msra.mxu0 %v169
    %738 = vmatprep.subr.mxu0 0.0
    %739 = vmatpush1.msra.mxu0 %v168
    %740 = vmatprep.subr.mxu0 0.0
    %741 = vmatpush1.msra.mxu0 %v167
    %742 = vmatprep.subr.mxu0 0.0
    %743 = vmatpush2.msra.mxu0 0.0
    %744 = vmatprep.subr.mxu0 0.0
    %745 = vmatpush2.msra.mxu0 0.0
    %746 = vmatprep.subr.mxu0 0.0
    %747 = vmatpush2.msra.mxu0 0.0
    %748 = vmatprep.subr.mxu0 0.0
    %749 = vmatpush2.msra.mxu0 0.0
    %750 = vmatprep.subr.mxu0 0.0
    %751 = vmatpush2.msra.mxu0 0.0
    %752 = vmatprep.subr.mxu0 0.0
    %753 = vmatpush2.msra.mxu0 0.0
    %754 = vmatprep.subr.mxu0 0.0
    %755 = vmatpush2.msra.mxu0 0.0
    %756 = vmatprep.subr.mxu0 0.0
    %757 = vmatpush2.msra.mxu0 0.0
    %758 = vmatprep.subr.mxu0 0.0
    %759 = vmatpush2.msra.mxu0 0.0
    %760 = vmatprep.subr.mxu0 0.0
    %761 = vmatpush2.msra.mxu0 0.0
    %762 = vmatprep.subr.mxu0 0.0
    %763 = vmatpush2.msra.mxu0 0.0
    %764 = vmatprep.subr.mxu0 0.0
    %765 = vmatpush2.msra.mxu0 0.0
    %766 = vmatprep.subr.mxu0 0.0
    %767 = vmatpush2.msra.mxu0 0.0
    %768 = vmatprep.subr.mxu0 0.0
    %769 = vmatpush2.msra.mxu0 0.0
    %770 = vmatprep.subr.mxu0 0.0
    %771 = vmatpush2.msra.mxu0 0.0
    %772 = vmatprep.subr.mxu0 0.0
    %773 = vmatpush2.msra.mxu0 0.0
    %774 = vmatprep.mubr.f32.mxu0 0.0
    %775 = vmatmul.mubr.f32.gmra.mxu0 %v706
    %v776 = vpop.f32.mrf.mxu0
    %v777 = vadd.f32 0.0, %v776
    %v778 = vpop.f32.mrf.mxu0
    %779 = vdwg.mxu0
    %v780 = vadd.f32 %v709, %v777
    %v781 = vtanh.pop %v780
    %782 = vst [vmem:[%s708] sm:$0xff] %v781
    %783 = vst [vmem:[#allocation2] sm:$0xff] %v781
    %v784 = vld [vmem:[#allocation3] sm:$0xff]
    %v785 = vld [vmem:[#allocation3 + $0x8] sm:$0xff]
    %v786 = vld [vmem:[#allocation3 + $0x10] sm:$0xff]
    %v787 = vld [vmem:[#allocation3 + $0x18] sm:$0xff]
    %v788 = vld [vmem:[#allocation3 + $0x20] sm:$0xff]
    %v789 = vld [vmem:[#allocation3 + $0x28] sm:$0xff]
    %v790 = vld [vmem:[#allocation3 + $0x30] sm:$0xff]
    %v791 = vld [vmem:[#allocation3 + $0x38] sm:$0xff]
    %v792 = vpack.c.bf16 %v785, %v784
    %v793 = vpack.c.bf16 %v787, %v786
    %v794 = vpack.c.bf16 %v789, %v788
    %v795 = vpack.c.bf16 %v791, %v790
    %v796 = vld [vmem:[%s4] sm:$0xf]
    %v797 = vld [vmem:[%s4 + $0x4] sm:$0xf]
    %v798 = vld [vmem:[%s4 + $0x8] sm:$0xf]
    %v799 = vld [vmem:[%s4 + $0xc] sm:$0xf]
    %v800 = vld [vmem:[%s4 + $0x10] sm:$0xf]
    %v801 = vld [vmem:[%s4 + $0x14] sm:$0xf]
    %v802 = vld [vmem:[%s4 + $0x18] sm:$0xf]
    %v803 = vld [vmem:[%s4 + $0x1c] sm:$0xf]
    %v804 = vld [vmem:[%s4 + $0x20] sm:$0xf]
    %v805 = vld [vmem:[%s4 + $0x24] sm:$0xf]
    %v806 = vld [vmem:[%s4 + $0x28] sm:$0xf]
    %v807 = vld [vmem:[%s4 + $0x2c] sm:$0xf]
    %v808 = vld [vmem:[%s4 + $0x30] sm:$0xf]
    %v809 = vld [vmem:[%s4 + $0x34] sm:$0xf]
    %v810 = vld [vmem:[%s4 + $0x38] sm:$0xf]
    %v811 = vld [vmem:[%s4 + $0x3c] sm:$0xf]
    %v812 = vld [vmem:[%s5] sm:$0x1]
    %v814 = vlaneseq
    %v815 = vshrl.u32 %v814, 7
    %v816 = vsub.s32 0, %v815
    %v817 = vrot.slane %v812, %v816
    %v835 = vunpack.c.l.b16 %v796
    %v836 = vunpack.c.l.b16 %v797
    %v837 = vunpack.c.l.b16 %v798
    %v838 = vunpack.c.l.b16 %v799
    %v839 = vunpack.c.l.b16 %v800
    %v840 = vunpack.c.l.b16 %v801
    %v841 = vunpack.c.l.b16 %v802
    %v842 = vunpack.c.l.b16 %v803
    %v843 = vunpack.c.l.b16 %v804
    %v844 = vunpack.c.l.b16 %v805
    %v845 = vunpack.c.l.b16 %v806
    %v846 = vunpack.c.l.b16 %v807
    %v847 = vunpack.c.l.b16 %v808
    %v848 = vunpack.c.l.b16 %v809
    %v849 = vunpack.c.l.b16 %v810
    %v850 = vunpack.c.l.b16 %v811
    %v851 = vpack.c.b16 %v836, %v835
    %v852 = vpack.c.b16 %v838, %v837
    %v853 = vpack.c.b16 %v840, %v839
    %v854 = vpack.c.b16 %v842, %v841
    %v855 = vpack.c.b16 %v844, %v843
    %v856 = vpack.c.b16 %v846, %v845
    %v857 = vpack.c.b16 %v848, %v847
    %v858 = vpack.c.b16 %v850, %v849
    %867 = vmatprep.subr.bf16.mxu0 0
    %868 = vmatpush1.bf16.msra.mxu0 %v858
    %869 = vmatprep.subr.bf16.mxu0 0
    %870 = vmatpush1.bf16.msra.mxu0 %v857
    %871 = vmatprep.subr.bf16.mxu0 0
    %872 = vmatpush1.bf16.msra.mxu0 %v856
    %873 = vmatprep.subr.bf16.mxu0 0
    %874 = vmatpush1.bf16.msra.mxu0 %v855
    %875 = vmatprep.subr.bf16.mxu0 0
    %876 = vmatpush1.bf16.msra.mxu0 %v854
    %877 = vmatprep.subr.bf16.mxu0 0
    %878 = vmatpush1.bf16.msra.mxu0 %v853
    %879 = vmatprep.subr.bf16.mxu0 0
    %880 = vmatpush1.bf16.msra.mxu0 %v852
    %881 = vmatprep.subr.bf16.mxu0 0
    %882 = vmatpush1.bf16.msra.mxu0 %v851
    %883 = vmatprep.subr.bf16.mxu0 0
    %884 = vmatpush2.bf16.msra.mxu0 0
    %885 = vmatprep.subr.bf16.mxu0 0
    %886 = vmatpush2.bf16.msra.mxu0 0
    %887 = vmatprep.subr.bf16.mxu0 0
    %888 = vmatpush2.bf16.msra.mxu0 0
    %889 = vmatprep.subr.bf16.mxu0 0
    %890 = vmatpush2.bf16.msra.mxu0 0
    %891 = vmatprep.subr.bf16.mxu0 0
    %892 = vmatpush2.bf16.msra.mxu0 0
    %893 = vmatprep.subr.bf16.mxu0 0
    %894 = vmatpush2.bf16.msra.mxu0 0
    %895 = vmatprep.subr.bf16.mxu0 0
    %896 = vmatpush2.bf16.msra.mxu0 0
    %897 = vmatprep.subr.bf16.mxu0 0
    %898 = vmatpush2.bf16.msra.mxu0 0
    %899 = vmatprep.mubr.bf16.mxu0 0
    %900 = vmatmul.mubr.bf16.gmra.mxu0 %v792
    %v901 = vpop.f32.mrf.mxu0
    %v902 = vadd.f32 %v817, %v901
    %v903 = vpop.f32.mrf.mxu0
    %v904 = vpop.f32.mrf.mxu0
    %v905 = vadd.f32 %v817, %v904
    %v906 = vpop.f32.mrf.mxu0
    %907 = vmatprep.mubr.bf16.mxu0 0
    %908 = vmatmul.mubr.bf16.gmra.mxu0 %v793
    %v909 = vpop.f32.mrf.mxu0
    %v910 = vadd.f32 %v817, %v909
    %v911 = vpop.f32.mrf.mxu0
    %v912 = vpop.f32.mrf.mxu0
    %v913 = vadd.f32 %v817, %v912
    %v914 = vpop.f32.mrf.mxu0
    %915 = vmatprep.mubr.bf16.mxu0 0
    %916 = vmatmul.mubr.bf16.gmra.mxu0 %v794
    %v917 = vpop.f32.mrf.mxu0
    %v918 = vadd.f32 %v817, %v917
    %v919 = vpop.f32.mrf.mxu0
    %v920 = vpop.f32.mrf.mxu0
    %v921 = vadd.f32 %v817, %v920
    %v922 = vpop.f32.mrf.mxu0
    %923 = vmatprep.mubr.bf16.mxu0 0
    %924 = vmatmul.mubr.bf16.gmra.mxu0 %v795
    %v925 = vpop.f32.mrf.mxu0
    %v926 = vadd.f32 %v817, %v925
    %v927 = vpop.f32.mrf.mxu0
    %v928 = vpop.f32.mrf.mxu0
    %v929 = vadd.f32 %v817, %v928
    %v930 = vpop.f32.mrf.mxu0
    %931 = vdwg.mxu0
    %932 = vst [vmem:[#allocation4] sm:$0xff] %v902
    %933 = vst [vmem:[#allocation4 + $0x8] sm:$0xff] %v905
    %934 = vst [vmem:[#allocation4 + $0x10] sm:$0xff] %v910
    %935 = vst [vmem:[#allocation4 + $0x18] sm:$0xff] %v913
    %936 = vst [vmem:[#allocation4 + $0x20] sm:$0xff] %v918
    %937 = vst [vmem:[#allocation4 + $0x28] sm:$0xff] %v921
    %938 = vst [vmem:[#allocation4 + $0x30] sm:$0xff] %v926
    %939 = vst [vmem:[#allocation4 + $0x38] sm:$0xff] %v929
    // Predicated region
    $region30: #{_rnn_forward_impl.1} parent=1 // pred_check
      _
    $region31: #{_rnn_forward_impl.1} parent=1 // pred_check_branch
      %941 = sbr.rel (0) target = $region33
    $region32: #{_rnn_forward_impl.1} parent=1 // pred_region
      %s943 = ssub.s32 1024, 1024
      %944 = vsyncadd [#allocation5], %s943
      %s945 = sshll.u32 [#allocation4], 4
      %s946 = int_to_ptr.vmem [resolvable:$true] %s945
      %951 = dma.vmem_to_hbm [thread:$0]  %s946, 1024, %s6, [#allocation5], 128, 128, 8
    $region33: #{_rnn_forward_impl.1} parent=1 // pred_fallthru
      _
    // Predicated region
    $region34: #{_rnn_forward_impl.1} parent=1 // pred_check
      _
    $region35: #{_rnn_forward_impl.1} parent=1 // pred_check_branch
      %953 = sbr.rel (0) target = $region37
    $region36: #{_rnn_forward_impl.1} parent=1 // pred_region
      %954 = dma.done [#allocation5], 1024
    $region37: #{_rnn_forward_impl.1} parent=1 // pred_fallthru
      _
    %955 = vsyncpa [#allocation5], 1

// kernel: _rnn_forward_impl.1
$region0: #{_rnn_forward_impl.1}
  #allocation0 [shape = 'u32[]', space=smem, size = 0x4, offset = 0x4, fixed_abs, tag = 'smem constant byte address 0x4 - core index']
  #allocation1 [shape = 'u32[144,128]{1,0:T(1,128)}', space=vmem, size = 0x12000, scoped, tag = 'internal scratch']
  #allocation2 [shape = 'f32[8,128]{1,0:T(8,128)}', space=vmem, size = 0x1000, scoped, tag = 'scratch operand']
  #allocation3 [shape = 'f32[64,128]{1,0:T(8,128)}', space=vmem, size = 0x8000, scoped, tag = 'scratch operand']
  %s0 = inlined_call_operand.vmem [shape: bf16[1,64,32], index: 0, kind: input, shape index: {}]
  %s1 = inlined_call_operand.vmem [shape: bf16[32,128], index: 1, kind: input, shape index: {}]
  %s2 = inlined_call_operand.vmem [shape: f32[128,128], index: 2, kind: input, shape index: {}]
  %s3 = inlined_call_operand.vmem [shape: f32[1,128], index: 3, kind: input, shape index: {}]
  %s4 = inlined_call_operand.vmem [shape: bf16[128,128], index: 4, kind: input, shape index: {}]
  %s5 = inlined_call_operand.vmem [shape: f32[1,128], index: 5, kind: input, shape index: {}]
  %s6 = inlined_call_operand.hbm [shape: f32[1,64,128], index: 6, kind: output, shape index: {}]
  %s7 = sld [smem:[#allocation0]]
  $region38: #{_rnn_forward_impl.1} parent=0
    _
  %s9 = ssub.s32 1, %s7
  %s10 = scalar_select 0, %s9, %s7
  $region1: #{_rnn_forward_impl.1} parent=0
    #allocation4 [shape = 'u8[32768]{0}', space=vmem, size = 0x8000, scoped, tag = 'output window, operand 0, single buffered']
    #allocation5 [shape = 's32[1]{0}', space=sflag, size = 0x4, scoped, tag = 'scoped memory for _rnn_forward_impl.1']
    %11 = vsyncpa [#allocation5], 0
    // Predicated region
    $region2: #{_rnn_forward_impl.1} parent=1 // pred_check
      _
    $region3: #{_rnn_forward_impl.1} parent=1 // pred_check_branch
      %13 = sbr.rel (0) target = $region5
    $region4: #{_rnn_forward_impl.1} parent=1 // pred_region
      _
    $region5: #{_rnn_forward_impl.1} parent=1 // pred_fallthru
      _
    // Predicated region
    $region6: #{_rnn_forward_impl.1} parent=1 // pred_check
      _
    $region7: #{_rnn_forward_impl.1} parent=1 // pred_check_branch
      %15 = sbr.rel (0) target = $region9
    $region8: #{_rnn_forward_impl.1} parent=1 // pred_region
      _
    $region9: #{_rnn_forward_impl.1} parent=1 // pred_fallthru
      _
    // Predicated region
    $region10: #{_rnn_forward_impl.1} parent=1 // pred_check
      _
    $region11: #{_rnn_forward_impl.1} parent=1 // pred_check_branch
      %17 = sbr.rel (0) target = $region13
    $region12: #{_rnn_forward_impl.1} parent=1 // pred_region
      _
    $region13: #{_rnn_forward_impl.1} parent=1 // pred_fallthru
      _
    // Predicated region
    $region14: #{_rnn_forward_impl.1} parent=1 // pred_check
      _
    $region15: #{_rnn_forward_impl.1} parent=1 // pred_check_branch
      %19 = sbr.rel (0) target = $region17
    $region16: #{_rnn_forward_impl.1} parent=1 // pred_region
      _
    $region17: #{_rnn_forward_impl.1} parent=1 // pred_fallthru
      _
    // Predicated region
    $region18: #{_rnn_forward_impl.1} parent=1 // pred_check
      _
    $region19: #{_rnn_forward_impl.1} parent=1 // pred_check_branch
      %21 = sbr.rel (0) target = $region21
    $region20: #{_rnn_forward_impl.1} parent=1 // pred_region
      _
    $region21: #{_rnn_forward_impl.1} parent=1 // pred_fallthru
      _
    // Predicated region
    $region22: #{_rnn_forward_impl.1} parent=1 // pred_check
      _
    $region23: #{_rnn_forward_impl.1} parent=1 // pred_check_branch
      %23 = sbr.rel (0) target = $region25
    $region24: #{_rnn_forward_impl.1} parent=1 // pred_region
      _
    $region25: #{_rnn_forward_impl.1} parent=1 // pred_fallthru
      _
    %p25 = scmp.eq.s32.totalorder 0, 0
    // Predicated region
    $region26: #{_rnn_forward_impl.1} parent=1 // pred_check
      %p26 = pneg %p25
    $region27: #{_rnn_forward_impl.1} parent=1 // pred_check_branch
      %28 = sbr.rel (%p26) target = $region29
    $region28: #{_rnn_forward_impl.1} parent=1 // pred_region
      %29 = vst [vmem:[#allocation2] sm:$0xff] 0.0
    $region29: #{_rnn_forward_impl.1} parent=1 // pred_fallthru
      _
    %v30 = vld [vmem:[%s0] sm:$0xf]
    %v31 = vld [vmem:[%s0 + $0x4] sm:$0xf]
    %v32 = vld [vmem:[%s0 + $0x8] sm:$0xf]
    %v33 = vld [vmem:[%s0 + $0xc] sm:$0xf]
    %v34 = vld [vmem:[%s0 + $0x10] sm:$0xf]
    %v35 = vld [vmem:[%s0 + $0x14] sm:$0xf]
    %v36 = vld [vmem:[%s0 + $0x18] sm:$0xf]
    %v37 = vld [vmem:[%s0 + $0x1c] sm:$0xf]
    %v38 = vld [vmem:[%s1] sm:$0xf]
    %v39 = vld [vmem:[%s1 + $0x4] sm:$0xf]
    %v40 = vld [vmem:[%s1 + $0x8] sm:$0xf]
    %v41 = vld [vmem:[%s1 + $0xc] sm:$0xf]
    %v42 = vld [vmem:[%s3] sm:$0x1]
    %v44 = vlaneseq
    %v45 = vshrl.u32 %v44, 7
    %v46 = vsub.s32 0, %v45
    %v47 = vrot.slane %v42, %v46
    %v57 = vunpack.c.l.b16 %v30
    %v58 = vunpack.c.l.b16 %v31
    %v59 = vunpack.c.l.b16 %v32
    %v60 = vunpack.c.l.b16 %v33
    %v61 = vunpack.c.l.b16 %v34
    %v62 = vunpack.c.l.b16 %v35
    %v63 = vunpack.c.l.b16 %v36
    %v64 = vunpack.c.l.b16 %v37
    %v65 = vpack.c.b16 %v58, %v57
    %v66 = vpack.c.b16 %v60, %v59
    %v67 = vpack.c.b16 %v62, %v61
    %v68 = vpack.c.b16 %v64, %v63
    %v73 = vunpack.c.l.b16 %v38
    %v74 = vunpack.c.l.b16 %v39
    %v75 = vunpack.c.l.b16 %v40
    %v76 = vunpack.c.l.b16 %v41
    %v77 = vpack.c.b16 %v74, %v73
    %v78 = vpack.c.b16 %v76, %v75
    %vm81 = vcmask 261120
    %v83 = vsel %vm81, %v65, 0
    %v86 = vsel %vm81, %v66, 0
    %v89 = vsel %vm81, %v67, 0
    %v92 = vsel %vm81, %v68, 0
    %94 = vmatprep.subr.bf16.mxu0 0
    %95 = vmatpush1.bf16.msra.mxu0 0
    %96 = vmatprep.subr.bf16.mxu0 0
    %97 = vmatpush1.bf16.msra.mxu0 0
    %98 = vmatprep.subr.bf16.mxu0 0
    %99 = vmatpush1.bf16.msra.mxu0 0
    %100 = vmatprep.subr.bf16.mxu0 0
    %101 = vmatpush1.bf16.msra.mxu0 0
    %102 = vmatprep.subr.bf16.mxu0 0
    %103 = vmatpush1.bf16.msra.mxu0 0
    %104 = vmatprep.subr.bf16.mxu0 0
    %105 = vmatpush1.bf16.msra.mxu0 0
    %106 = vmatprep.subr.bf16.mxu0 0
    %107 = vmatpush1.bf16.msra.mxu0 %v78
    %108 = vmatprep.subr.bf16.mxu0 0
    %109 = vmatpush1.bf16.msra.mxu0 %v77
    %110 = vmatprep.subr.bf16.mxu0 0
    %111 = vmatpush2.bf16.msra.mxu0 0
    %112 = vmatprep.subr.bf16.mxu0 0
    %113 = vmatpush2.bf16.msra.mxu0 0
    %114 = vmatprep.subr.bf16.mxu0 0
    %115 = vmatpush2.bf16.msra.mxu0 0
    %116 = vmatprep.subr.bf16.mxu0 0
    %117 = vmatpush2.bf16.msra.mxu0 0
    %118 = vmatprep.subr.bf16.mxu0 0
    %119 = vmatpush2.bf16.msra.mxu0 0
    %120 = vmatprep.subr.bf16.mxu0 0
    %121 = vmatpush2.bf16.msra.mxu0 0
    %122 = vmatprep.subr.bf16.mxu0 0
    %123 = vmatpush2.bf16.msra.mxu0 0
    %124 = vmatprep.subr.bf16.mxu0 0
    %125 = vmatpush2.bf16.msra.mxu0 0
    %126 = vmatprep.mubr.bf16.mxu0 0
    %127 = vmatmul.mubr.bf16.gmra.mxu0 %v83
    %v128 = vpop.f32.mrf.mxu0
    %v129 = vadd.f32 %v47, %v128
    %v130 = vpop.f32.mrf.mxu0
    %v131 = vpop.f32.mrf.mxu0
    %v132 = vadd.f32 %v47, %v131
    %v133 = vpop.f32.mrf.mxu0
    %134 = vmatprep.mubr.bf16.mxu0 0
    %135 = vmatmul.mubr.bf16.gmra.mxu0 %v86
    %v136 = vpop.f32.mrf.mxu0
    %v137 = vadd.f32 %v47, %v136
    %v138 = vpop.f32.mrf.mxu0
    %v139 = vpop.f32.mrf.mxu0
    %v140 = vadd.f32 %v47, %v139
    %v141 = vpop.f32.mrf.mxu0
    %142 = vmatprep.mubr.bf16.mxu0 0
    %143 = vmatmul.mubr.bf16.gmra.mxu0 %v89
    %v144 = vpop.f32.mrf.mxu0
    %v145 = vadd.f32 %v47, %v144
    %v146 = vpop.f32.mrf.mxu0
    %v147 = vpop.f32.mrf.mxu0
    %v148 = vadd.f32 %v47, %v147
    %v149 = vpop.f32.mrf.mxu0
    %150 = vmatprep.mubr.bf16.mxu0 0
    %151 = vmatmul.mubr.bf16.gmra.mxu0 %v92
    %v152 = vpop.f32.mrf.mxu0
    %v153 = vadd.f32 %v47, %v152
    %v154 = vpop.f32.mrf.mxu0
    %v155 = vpop.f32.mrf.mxu0
    %v156 = vadd.f32 %v47, %v155
    %v157 = vpop.f32.mrf.mxu0
    %158 = vdwg.mxu0
    %159 = vst [vmem:[#allocation3] sm:$0xff] %v129
    %160 = vst [vmem:[#allocation3 + $0x8] sm:$0xff] %v132
    %161 = vst [vmem:[#allocation3 + $0x10] sm:$0xff] %v137
    %162 = vst [vmem:[#allocation3 + $0x18] sm:$0xff] %v140
    %163 = vst [vmem:[#allocation3 + $0x20] sm:$0xff] %v145
    %164 = vst [vmem:[#allocation3 + $0x28] sm:$0xff] %v148
    %165 = vst [vmem:[#allocation3 + $0x30] sm:$0xff] %v153
    %166 = vst [vmem:[#allocation3 + $0x38] sm:$0xff] %v156
    %v167 = vld [vmem:[%s2] sm:$0xff]
    %v168 = vld [vmem:[%s2 + $0x8] sm:$0xff]
    %v169 = vld [vmem:[%s2 + $0x10] sm:$0xff]
    %v170 = vld [vmem:[%s2 + $0x18] sm:$0xff]
    %v171 = vld [vmem:[%s2 + $0x20] sm:$0xff]
    %v172 = vld [vmem:[%s2 + $0x28] sm:$0xff]
    %v173 = vld [vmem:[%s2 + $0x30] sm:$0xff]
    %v174 = vld [vmem:[%s2 + $0x38] sm:$0xff]
    %v175 = vld [vmem:[%s2 + $0x40] sm:$0xff]
    %v176 = vld [vmem:[%s2 + $0x48] sm:$0xff]
    %v177 = vld [vmem:[%s2 + $0x50] sm:$0xff]
    %v178 = vld [vmem:[%s2 + $0x58] sm:$0xff]
    %v179 = vld [vmem:[%s2 + $0x60] sm:$0xff]
    %v180 = vld [vmem:[%s2 + $0x68] sm:$0xff]
    %v181 = vld [vmem:[%s2 + $0x70] sm:$0xff]
    %v182 = vld [vmem:[%s2 + $0x78] sm:$0xff]
    %v183 = vld [vmem:[#allocation2] sm:$0xff]
    %v184 = vld [vmem:[#allocation3] sm:$0xff]
    %185 = vmatprep.subr.mxu0 0.0
    %186 = vmatpush1.msra.mxu0 %v182
    %187 = vmatprep.subr.mxu0 0.0
    %188 = vmatpush1.msra.mxu0 %v181
    %189 = vmatprep.subr.mxu0 0.0
    %190 = vmatpush1.msra.mxu0 %v180
    %191 = vmatprep.subr.mxu0 0.0
    %192 = vmatpush1.msra.mxu0 %v179
    %193 = vmatprep.subr.mxu0 0.0
    %194 = vmatpush1.msra.mxu0 %v178
    %195 = vmatprep.subr.mxu0 0.0
    %196 = vmatpush1.msra.mxu0 %v177
    %197 = vmatprep.subr.mxu0 0.0
    %198 = vmatpush1.msra.mxu0 %v176
    %199 = vmatprep.subr.mxu0 0.0
    %200 = vmatpush1.msra.mxu0 %v175
    %201 = vmatprep.subr.mxu0 0.0
    %202 = vmatpush1.msra.mxu0 %v174
    %203 = vmatprep.subr.mxu0 0.0
    %204 = vmatpush1.msra.mxu0 %v173
    %205 = vmatprep.subr.mxu0 0.0
    %206 = vmatpush1.msra.mxu0 %v172
    %207 = vmatprep.subr.mxu0 0.0
    %208 = vmatpush1.msra.mxu0 %v171
    %209 = vmatprep.subr.mxu0 0.0
    %210 = vmatpush1.msra.mxu0 %v170
    %211 = vmatprep.subr.mxu0 0.0
    %212 = vmatpush1.msra.mxu0 %v169
    %213 = vmatprep.subr.mxu0 0.0
    %214 = vmatpush1.msra.mxu0 %v168
    %215 = vmatprep.subr.mxu0 0.0
    %216 = vmatpush1.msra.mxu0 %v167
    %217 = vmatprep.subr.mxu0 0.0
    %218 = vmatpush2.msra.mxu0 0.0
    %219 = vmatprep.subr.mxu0 0.0
    %220 = vmatpush2.msra.mxu0 0.0
    %221 = vmatprep.subr.mxu0 0.0
    %222 = vmatpush2.msra.mxu0 0.0
    %223 = vmatprep.subr.mxu0 0.0
    %224 = vmatpush2.msra.mxu0 0.0
    %225 = vmatprep.subr.mxu0 0.0
    %226 = vmatpush2.msra.mxu0 0.0
    %227 = vmatprep.subr.mxu0 0.0
    %228 = vmatpush2.msra.mxu0 0.0
    %229 = vmatprep.subr.mxu0 0.0
    %230 = vmatpush2.msra.mxu0 0.0
    %231 = vmatprep.subr.mxu0 0.0
    %232 = vmatpush2.msra.mxu0 0.0
    %233 = vmatprep.subr.mxu0 0.0
    %234 = vmatpush2.msra.mxu0 0.0
    %235 = vmatprep.subr.mxu0 0.0
    %236 = vmatpush2.msra.mxu0 0.0
    %237 = vmatprep.subr.mxu0 0.0
    %238 = vmatpush2.msra.mxu0 0.0
    %239 = vmatprep.subr.mxu0 0.0
    %240 = vmatpush2.msra.mxu0 0.0
    %241 = vmatprep.subr.mxu0 0.0
    %242 = vmatpush2.msra.mxu0 0.0
    %243 = vmatprep.subr.mxu0 0.0
    %244 = vmatpush2.msra.mxu0 0.0
    %245 = vmatprep.subr.mxu0 0.0
    %246 = vmatpush2.msra.mxu0 0.0
    %247 = vmatprep.subr.mxu0 0.0
    %248 = vmatpush2.msra.mxu0 0.0
    %249 = vmatprep.mubr.f32.mxu0 0.0
    %250 = vmatmul.mubr.f32.gmra.mxu0 %v183
    %v251 = vpop.f32.mrf.mxu0
    %v252 = vadd.f32 0.0, %v251
    %v253 = vpop.f32.mrf.mxu0
    %254 = vdwg.mxu0
    %v255 = vadd.f32 %v184, %v252
    %v256 = vtanh.pop %v255
    %257 = vst [vmem:[#allocation3] sm:$0xff] %v256
    %s258 = scalar_lea.vmem [#allocation3], 8
    %v259 = vld [vmem:[%s258] sm:$0xff]
    %260 = vmatprep.subr.mxu0 0.0
    %261 = vmatpush1.msra.mxu0 %v182
    %262 = vmatprep.subr.mxu0 0.0
    %263 = vmatpush1.msra.mxu0 %v181
    %264 = vmatprep.subr.mxu0 0.0
    %265 = vmatpush1.msra.mxu0 %v180
    %266 = vmatprep.subr.mxu0 0.0
    %267 = vmatpush1.msra.mxu0 %v179
    %268 = vmatprep.subr.mxu0 0.0
    %269 = vmatpush1.msra.mxu0 %v178
    %270 = vmatprep.subr.mxu0 0.0
    %271 = vmatpush1.msra.mxu0 %v177
    %272 = vmatprep.subr.mxu0 0.0
    %273 = vmatpush1.msra.mxu0 %v176
    %274 = vmatprep.subr.mxu0 0.0
    %275 = vmatpush1.msra.mxu0 %v175
    %276 = vmatprep.subr.mxu0 0.0
    %277 = vmatpush1.msra.mxu0 %v174
    %278 = vmatprep.subr.mxu0 0.0
    %279 = vmatpush1.msra.mxu0 %v173
    %280 = vmatprep.subr.mxu0 0.0
    %281 = vmatpush1.msra.mxu0 %v172
    %282 = vmatprep.subr.mxu0 0.0
    %283 = vmatpush1.msra.mxu0 %v171
    %284 = vmatprep.subr.mxu0 0.0
    %285 = vmatpush1.msra.mxu0 %v170
    %286 = vmatprep.subr.mxu0 0.0
    %287 = vmatpush1.msra.mxu0 %v169
    %288 = vmatprep.subr.mxu0 0.0
    %289 = vmatpush1.msra.mxu0 %v168
    %290 = vmatprep.subr.mxu0 0.0
    %291 = vmatpush1.msra.mxu0 %v167
    %292 = vmatprep.subr.mxu0 0.0
    %293 = vmatpush2.msra.mxu0 0.0
    %294 = vmatprep.subr.mxu0 0.0
    %295 = vmatpush2.msra.mxu0 0.0
    %296 = vmatprep.subr.mxu0 0.0
    %297 = vmatpush2.msra.mxu0 0.0
    %298 = vmatprep.subr.mxu0 0.0
    %299 = vmatpush2.msra.mxu0 0.0
    %300 = vmatprep.subr.mxu0 0.0
    %301 = vmatpush2.msra.mxu0 0.0
    %302 = vmatprep.subr.mxu0 0.0
    %303 = vmatpush2.msra.mxu0 0.0
    %304 = vmatprep.subr.mxu0 0.0
    %305 = vmatpush2.msra.mxu0 0.0
    %306 = vmatprep.subr.mxu0 0.0
    %307 = vmatpush2.msra.mxu0 0.0
    %308 = vmatprep.subr.mxu0 0.0
    %309 = vmatpush2.msra.mxu0 0.0
    %310 = vmatprep.subr.mxu0 0.0
    %311 = vmatpush2.msra.mxu0 0.0
    %312 = vmatprep.subr.mxu0 0.0
    %313 = vmatpush2.msra.mxu0 0.0
    %314 = vmatprep.subr.mxu0 0.0
    %315 = vmatpush2.msra.mxu0 0.0
    %316 = vmatprep.subr.mxu0 0.0
    %317 = vmatpush2.msra.mxu0 0.0
    %318 = vmatprep.subr.mxu0 0.0
    %319 = vmatpush2.msra.mxu0 0.0
    %320 = vmatprep.subr.mxu0 0.0
    %321 = vmatpush2.msra.mxu0 0.0
    %322 = vmatprep.subr.mxu0 0.0
    %323 = vmatpush2.msra.mxu0 0.0
    %324 = vmatprep.mubr.f32.mxu0 0.0
    %325 = vmatmul.mubr.f32.gmra.mxu0 %v256
    %v326 = vpop.f32.mrf.mxu0
    %v327 = vadd.f32 0.0, %v326
    %v328 = vpop.f32.mrf.mxu0
    %329 = vdwg.mxu0
    %v330 = vadd.f32 %v259, %v327
    %v331 = vtanh.pop %v330
    %332 = vst [vmem:[%s258] sm:$0xff] %v331
    %s333 = scalar_lea.vmem [#allocation3], 16
    %v334 = vld [vmem:[%s333] sm:$0xff]
    %335 = vmatprep.subr.mxu0 0.0
    %336 = vmatpush1.msra.mxu0 %v182
    %337 = vmatprep.subr.mxu0 0.0
    %338 = vmatpush1.msra.mxu0 %v181
    %339 = vmatprep.subr.mxu0 0.0
    %340 = vmatpush1.msra.mxu0 %v180
    %341 = vmatprep.subr.mxu0 0.0
    %342 = vmatpush1.msra.mxu0 %v179
    %343 = vmatprep.subr.mxu0 0.0
    %344 = vmatpush1.msra.mxu0 %v178
    %345 = vmatprep.subr.mxu0 0.0
    %346 = vmatpush1.msra.mxu0 %v177
    %347 = vmatprep.subr.mxu0 0.0
    %348 = vmatpush1.msra.mxu0 %v176
    %349 = vmatprep.subr.mxu0 0.0
    %350 = vmatpush1.msra.mxu0 %v175
    %351 = vmatprep.subr.mxu0 0.0
    %352 = vmatpush1.msra.mxu0 %v174
    %353 = vmatprep.subr.mxu0 0.0
    %354 = vmatpush1.msra.mxu0 %v173
    %355 = vmatprep.subr.mxu0 0.0
    %356 = vmatpush1.msra.mxu0 %v172
    %357 = vmatprep.subr.mxu0 0.0
    %358 = vmatpush1.msra.mxu0 %v171
    %359 = vmatprep.subr.mxu0 0.0
    %360 = vmatpush1.msra.mxu0 %v170
    %361 = vmatprep.subr.mxu0 0.0
    %362 = vmatpush1.msra.mxu0 %v169
    %363 = vmatprep.subr.mxu0 0.0
    %364 = vmatpush1.msra.mxu0 %v168
    %365 = vmatprep.subr.mxu0 0.0
    %366 = vmatpush1.msra.mxu0 %v167
    %367 = vmatprep.subr.mxu0 0.0
    %368 = vmatpush2.msra.mxu0 0.0
    %369 = vmatprep.subr.mxu0 0.0
    %370 = vmatpush2.msra.mxu0 0.0
    %371 = vmatprep.subr.mxu0 0.0
    %372 = vmatpush2.msra.mxu0 0.0
    %373 = vmatprep.subr.mxu0 0.0
    %374 = vmatpush2.msra.mxu0 0.0
    %375 = vmatprep.subr.mxu0 0.0
    %376 = vmatpush2.msra.mxu0 0.0
    %377 = vmatprep.subr.mxu0 0.0
    %378 = vmatpush2.msra.mxu0 0.0
    %379 = vmatprep.subr.mxu0 0.0
    %380 = vmatpush2.msra.mxu0 0.0
    %381 = vmatprep.subr.mxu0 0.0
    %382 = vmatpush2.msra.mxu0 0.0
    %383 = vmatprep.subr.mxu0 0.0
    %384 = vmatpush2.msra.mxu0 0.0
    %385 = vmatprep.subr.mxu0 0.0
    %386 = vmatpush2.msra.mxu0 0.0
    %387 = vmatprep.subr.mxu0 0.0
    %388 = vmatpush2.msra.mxu0 0.0
    %389 = vmatprep.subr.mxu0 0.0
    %390 = vmatpush2.msra.mxu0 0.0
    %391 = vmatprep.subr.mxu0 0.0
    %392 = vmatpush2.msra.mxu0 0.0
    %393 = vmatprep.subr.mxu0 0.0
    %394 = vmatpush2.msra.mxu0 0.0
    %395 = vmatprep.subr.mxu0 0.0
    %396 = vmatpush2.msra.mxu0 0.0
    %397 = vmatprep.subr.mxu0 0.0
    %398 = vmatpush2.msra.mxu0 0.0
    %399 = vmatprep.mubr.f32.mxu0 0.0
    %400 = vmatmul.mubr.f32.gmra.mxu0 %v331
    %v401 = vpop.f32.mrf.mxu0
    %v402 = vadd.f32 0.0, %v401
    %v403 = vpop.f32.mrf.mxu0
    %404 = vdwg.mxu0
    %v405 = vadd.f32 %v334, %v402
    %v406 = vtanh.pop %v405
    %407 = vst [vmem:[%s333] sm:$0xff] %v406
    %s408 = scalar_lea.vmem [#allocation3], 24
    %v409 = vld [vmem:[%s408] sm:$0xff]
    %410 = vmatprep.subr.mxu0 0.0
    %411 = vmatpush1.msra.mxu0 %v182
    %412 = vmatprep.subr.mxu0 0.0
    %413 = vmatpush1.msra.mxu0 %v181
    %414 = vmatprep.subr.mxu0 0.0
    %415 = vmatpush1.msra.mxu0 %v180
    %416 = vmatprep.subr.mxu0 0.0
    %417 = vmatpush1.msra.mxu0 %v179
    %418 = vmatprep.subr.mxu0 0.0
    %419 = vmatpush1.msra.mxu0 %v178
    %420 = vmatprep.subr.mxu0 0.0
    %421 = vmatpush1.msra.mxu0 %v177
    %422 = vmatprep.subr.mxu0 0.0
    %423 = vmatpush1.msra.mxu0 %v176
    %424 = vmatprep.subr.mxu0 0.0
    %425 = vmatpush1.msra.mxu0 %v175
    %426 = vmatprep.subr.mxu0 0.0
    %427 = vmatpush1.msra.mxu0 %v174
    %428 = vmatprep.subr.mxu0 0.0
    %429 = vmatpush1.msra.mxu0 %v173
    %430 = vmatprep.subr.mxu0 0.0
    %431 = vmatpush1.msra.mxu0 %v172
    %432 = vmatprep.subr.mxu0 0.0
    %433 = vmatpush1.msra.mxu0 %v171
    %434 = vmatprep.subr.mxu0 0.0
    %435 = vmatpush1.msra.mxu0 %v170
    %436 = vmatprep.subr.mxu0 0.0
    %437 = vmatpush1.msra.mxu0 %v169
    %438 = vmatprep.subr.mxu0 0.0
    %439 = vmatpush1.msra.mxu0 %v168
    %440 = vmatprep.subr.mxu0 0.0
    %441 = vmatpush1.msra.mxu0 %v167
    %442 = vmatprep.subr.mxu0 0.0
    %443 = vmatpush2.msra.mxu0 0.0
    %444 = vmatprep.subr.mxu0 0.0
    %445 = vmatpush2.msra.mxu0 0.0
    %446 = vmatprep.subr.mxu0 0.0
    %447 = vmatpush2.msra.mxu0 0.0
    %448 = vmatprep.subr.mxu0 0.0
    %449 = vmatpush2.msra.mxu0 0.0
    %450 = vmatprep.subr.mxu0 0.0
    %451 = vmatpush2.msra.mxu0 0.0
    %452 = vmatprep.subr.mxu0 0.0
    %453 = vmatpush2.msra.mxu0 0.0
    %454 = vmatprep.subr.mxu0 0.0
    %455 = vmatpush2.msra.mxu0 0.0
    %456 = vmatprep.subr.mxu0 0.0
    %457 = vmatpush2.msra.mxu0 0.0
    %458 = vmatprep.subr.mxu0 0.0
    %459 = vmatpush2.msra.mxu0 0.0
    %460 = vmatprep.subr.mxu0 0.0
    %461 = vmatpush2.msra.mxu0 0.0
    %462 = vmatprep.subr.mxu0 0.0
    %463 = vmatpush2.msra.mxu0 0.0
    %464 = vmatprep.subr.mxu0 0.0
    %465 = vmatpush2.msra.mxu0 0.0
    %466 = vmatprep.subr.mxu0 0.0
    %467 = vmatpush2.msra.mxu0 0.0
    %468 = vmatprep.subr.mxu0 0.0
    %469 = vmatpush2.msra.mxu0 0.0
    %470 = vmatprep.subr.mxu0 0.0
    %471 = vmatpush2.msra.mxu0 0.0
    %472 = vmatprep.subr.mxu0 0.0
    %473 = vmatpush2.msra.mxu0 0.0
    %474 = vmatprep.mubr.f32.mxu0 0.0
    %475 = vmatmul.mubr.f32.gmra.mxu0 %v406
    %v476 = vpop.f32.mrf.mxu0
    %v477 = vadd.f32 0.0, %v476
    %v478 = vpop.f32.mrf.mxu0
    %479 = vdwg.mxu0
    %v480 = vadd.f32 %v409, %v477
    %v481 = vtanh.pop %v480
    %482 = vst [vmem:[%s408] sm:$0xff] %v481
    %s483 = scalar_lea.vmem [#allocation3], 32
    %v484 = vld [vmem:[%s483] sm:$0xff]
    %485 = vmatprep.subr.mxu0 0.0
    %486 = vmatpush1.msra.mxu0 %v182
    %487 = vmatprep.subr.mxu0 0.0
    %488 = vmatpush1.msra.mxu0 %v181
    %489 = vmatprep.subr.mxu0 0.0
    %490 = vmatpush1.msra.mxu0 %v180
    %491 = vmatprep.subr.mxu0 0.0
    %492 = vmatpush1.msra.mxu0 %v179
    %493 = vmatprep.subr.mxu0 0.0
    %494 = vmatpush1.msra.mxu0 %v178
    %495 = vmatprep.subr.mxu0 0.0
    %496 = vmatpush1.msra.mxu0 %v177
    %497 = vmatprep.subr.mxu0 0.0
    %498 = vmatpush1.msra.mxu0 %v176
    %499 = vmatprep.subr.mxu0 0.0
    %500 = vmatpush1.msra.mxu0 %v175
    %501 = vmatprep.subr.mxu0 0.0
    %502 = vmatpush1.msra.mxu0 %v174
    %503 = vmatprep.subr.mxu0 0.0
    %504 = vmatpush1.msra.mxu0 %v173
    %505 = vmatprep.subr.mxu0 0.0
    %506 = vmatpush1.msra.mxu0 %v172
    %507 = vmatprep.subr.mxu0 0.0
    %508 = vmatpush1.msra.mxu0 %v171
    %509 = vmatprep.subr.mxu0 0.0
    %510 = vmatpush1.msra.mxu0 %v170
    %511 = vmatprep.subr.mxu0 0.0
    %512 = vmatpush1.msra.mxu0 %v169
    %513 = vmatprep.subr.mxu0 0.0
    %514 = vmatpush1.msra.mxu0 %v168
    %515 = vmatprep.subr.mxu0 0.0
    %516 = vmatpush1.msra.mxu0 %v167
    %517 = vmatprep.subr.mxu0 0.0
    %518 = vmatpush2.msra.mxu0 0.0
    %519 = vmatprep.subr.mxu0 0.0
    %520 = vmatpush2.msra.mxu0 0.0
    %521 = vmatprep.subr.mxu0 0.0
    %522 = vmatpush2.msra.mxu0 0.0
    %523 = vmatprep.subr.mxu0 0.0
    %524 = vmatpush2.msra.mxu0 0.0
    %525 = vmatprep.subr.mxu0 0.0
    %526 = vmatpush2.msra.mxu0 0.0
    %527 = vmatprep.subr.mxu0 0.0
    %528 = vmatpush2.msra.mxu0 0.0
    %529 = vmatprep.subr.mxu0 0.0
    %530 = vmatpush2.msra.mxu0 0.0
    %531 = vmatprep.subr.mxu0 0.0
    %532 = vmatpush2.msra.mxu0 0.0
    %533 = vmatprep.subr.mxu0 0.0
    %534 = vmatpush2.msra.mxu0 0.0
    %535 = vmatprep.subr.mxu0 0.0
    %536 = vmatpush2.msra.mxu0 0.0
    %537 = vmatprep.subr.mxu0 0.0
    %538 = vmatpush2.msra.mxu0 0.0
    %539 = vmatprep.subr.mxu0 0.0
    %540 = vmatpush2.msra.mxu0 0.0
    %541 = vmatprep.subr.mxu0 0.0
    %542 = vmatpush2.msra.mxu0 0.0
    %543 = vmatprep.subr.mxu0 0.0
    %544 = vmatpush2.msra.mxu0 0.0
    %545 = vmatprep.subr.mxu0 0.0
    %546 = vmatpush2.msra.mxu0 0.0
    %547 = vmatprep.subr.mxu0 0.0
    %548 = vmatpush2.msra.mxu0 0.0
    %549 = vmatprep.mubr.f32.mxu0 0.0
    %550 = vmatmul.mubr.f32.gmra.mxu0 %v481
    %v551 = vpop.f32.mrf.mxu0
    %v552 = vadd.f32 0.0, %v551
    %v553 = vpop.f32.mrf.mxu0
    %554 = vdwg.mxu0
    %v555 = vadd.f32 %v484, %v552
    %v556 = vtanh.pop %v555
    %557 = vst [vmem:[%s483] sm:$0xff] %v556
    %s558 = scalar_lea.vmem [#allocation3], 40
    %v559 = vld [vmem:[%s558] sm:$0xff]
    %560 = vmatprep.subr.mxu0 0.0
    %561 = vmatpush1.msra.mxu0 %v182
    %562 = vmatprep.subr.mxu0 0.0
    %563 = vmatpush1.msra.mxu0 %v181
    %564 = vmatprep.subr.mxu0 0.0
    %565 = vmatpush1.msra.mxu0 %v180
    %566 = vmatprep.subr.mxu0 0.0
    %567 = vmatpush1.msra.mxu0 %v179
    %568 = vmatprep.subr.mxu0 0.0
    %569 = vmatpush1.msra.mxu0 %v178
    %570 = vmatprep.subr.mxu0 0.0
    %571 = vmatpush1.msra.mxu0 %v177
    %572 = vmatprep.subr.mxu0 0.0
    %573 = vmatpush1.msra.mxu0 %v176
    %574 = vmatprep.subr.mxu0 0.0
    %575 = vmatpush1.msra.mxu0 %v175
    %576 = vmatprep.subr.mxu0 0.0
    %577 = vmatpush1.msra.mxu0 %v174
    %578 = vmatprep.subr.mxu0 0.0
    %579 = vmatpush1.msra.mxu0 %v173
    %580 = vmatprep.subr.mxu0 0.0
    %581 = vmatpush1.msra.mxu0 %v172
    %582 = vmatprep.subr.mxu0 0.0
    %583 = vmatpush1.msra.mxu0 %v171
    %584 = vmatprep.subr.mxu0 0.0
    %585 = vmatpush1.msra.mxu0 %v170
    %586 = vmatprep.subr.mxu0 0.0
    %587 = vmatpush1.msra.mxu0 %v169
    %588 = vmatprep.subr.mxu0 0.0
    %589 = vmatpush1.msra.mxu0 %v168
    %590 = vmatprep.subr.mxu0 0.0
    %591 = vmatpush1.msra.mxu0 %v167
    %592 = vmatprep.subr.mxu0 0.0
    %593 = vmatpush2.msra.mxu0 0.0
    %594 = vmatprep.subr.mxu0 0.0
    %595 = vmatpush2.msra.mxu0 0.0
    %596 = vmatprep.subr.mxu0 0.0
    %597 = vmatpush2.msra.mxu0 0.0
    %598 = vmatprep.subr.mxu0 0.0
    %599 = vmatpush2.msra.mxu0 0.0
    %600 = vmatprep.subr.mxu0 0.0
    %601 = vmatpush2.msra.mxu0 0.0
    %602 = vmatprep.subr.mxu0 0.0
    %603 = vmatpush2.msra.mxu0 0.0
    %604 = vmatprep.subr.mxu0 0.0
    %605 = vmatpush2.msra.mxu0 0.0
    %606 = vmatprep.subr.mxu0 0.0
    %607 = vmatpush2.msra.mxu0 0.0
    %608 = vmatprep.subr.mxu0 0.0
    %609 = vmatpush2.msra.mxu0 0.0
    %610 = vmatprep.subr.mxu0 0.0
    %611 = vmatpush2.msra.mxu0 0.0
    %612 = vmatprep.subr.mxu0 0.0
    %613 = vmatpush2.msra.mxu0 0.0
    %614 = vmatprep.subr.mxu0 0.0
    %615 = vmatpush2.msra.mxu0 0.0
    %616 = vmatprep.subr.mxu0 0.0
    %617 = vmatpush2.msra.mxu0 0.0
    %618 = vmatprep.subr.mxu0 0.0
    %619 = vmatpush2.msra.mxu0 0.0
    %620 = vmatprep.subr.mxu0 0.0
    %621 = vmatpush2.msra.mxu0 0.0
    %622 = vmatprep.subr.mxu0 0.0
    %623 = vmatpush2.msra.mxu0 0.0
    %624 = vmatprep.mubr.f32.mxu0 0.0
    %625 = vmatmul.mubr.f32.gmra.mxu0 %v556
    %v626 = vpop.f32.mrf.mxu0
    %v627 = vadd.f32 0.0, %v626
    %v628 = vpop.f32.mrf.mxu0
    %629 = vdwg.mxu0
    %v630 = vadd.f32 %v559, %v627
    %v631 = vtanh.pop %v630
    %632 = vst [vmem:[%s558] sm:$0xff] %v631
    %s633 = scalar_lea.vmem [#allocation3], 48
    %v634 = vld [vmem:[%s633] sm:$0xff]
    %635 = vmatprep.subr.mxu0 0.0
    %636 = vmatpush1.msra.mxu0 %v182
    %637 = vmatprep.subr.mxu0 0.0
    %638 = vmatpush1.msra.mxu0 %v181
    %639 = vmatprep.subr.mxu0 0.0
    %640 = vmatpush1.msra.mxu0 %v180
    %641 = vmatprep.subr.mxu0 0.0
    %642 = vmatpush1.msra.mxu0 %v179
    %643 = vmatprep.subr.mxu0 0.0
    %644 = vmatpush1.msra.mxu0 %v178
    %645 = vmatprep.subr.mxu0 0.0
    %646 = vmatpush1.msra.mxu0 %v177
    %647 = vmatprep.subr.mxu0 0.0
    %648 = vmatpush1.msra.mxu0 %v176
    %649 = vmatprep.subr.mxu0 0.0
    %650 = vmatpush1.msra.mxu0 %v175
    %651 = vmatprep.subr.mxu0 0.0
    %652 = vmatpush1.msra.mxu0 %v174
    %653 = vmatprep.subr.mxu0 0.0
    %654 = vmatpush1.msra.mxu0 %v173
    %655 = vmatprep.subr.mxu0 0.0
    %656 = vmatpush1.msra.mxu0 %v172
    %657 = vmatprep.subr.mxu0 0.0
    %658 = vmatpush1.msra.mxu0 %v171
    %659 = vmatprep.subr.mxu0 0.0
    %660 = vmatpush1.msra.mxu0 %v170
    %661 = vmatprep.subr.mxu0 0.0
    %662 = vmatpush1.msra.mxu0 %v169
    %663 = vmatprep.subr.mxu0 0.0
    %664 = vmatpush1.msra.mxu0 %v168
    %665 = vmatprep.subr.mxu0 0.0
    %666 = vmatpush1.msra.mxu0 %v167
    %667 = vmatprep.subr.mxu0 0.0
    %668 = vmatpush2.msra.mxu0 0.0
    %669 = vmatprep.subr.mxu0 0.0
    %670 = vmatpush2.msra.mxu0 0.0
    %671 = vmatprep.subr.mxu0 0.0
    %672 = vmatpush2.msra.mxu0 0.0
    %673 = vmatprep.subr.mxu0 0.0
    %674 = vmatpush2.msra.mxu0 0.0
    %675 = vmatprep.subr.mxu0 0.0
    %676 = vmatpush2.msra.mxu0 0.0
    %677 = vmatprep.subr.mxu0 0.0
    %678 = vmatpush2.msra.mxu0 0.0
    %679 = vmatprep.subr.mxu0 0.0
    %680 = vmatpush2.msra.mxu0 0.0
    %681 = vmatprep.subr.mxu0 0.0
    %682 = vmatpush2.msra.mxu0 0.0
    %683 = vmatprep.subr.mxu0 0.0
    %684 = vmatpush2.msra.mxu0 0.0
    %685 = vmatprep.subr.mxu0 0.0
    %686 = vmatpush2.msra.mxu0 0.0
    %687 = vmatprep.subr.mxu0 0.0
    %688 = vmatpush2.msra.mxu0 0.0
    %689 = vmatprep.subr.mxu0 0.0
    %690 = vmatpush2.msra.mxu0 0.0
    %691 = vmatprep.subr.mxu0 0.0
    %692 = vmatpush2.msra.mxu0 0.0
    %693 = vmatprep.subr.mxu0 0.0
    %694 = vmatpush2.msra.mxu0 0.0
    %695 = vmatprep.subr.mxu0 0.0
    %696 = vmatpush2.msra.mxu0 0.0
    %697 = vmatprep.subr.mxu0 0.0
    %698 = vmatpush2.msra.mxu0 0.0
    %699 = vmatprep.mubr.f32.mxu0 0.0
    %700 = vmatmul.mubr.f32.gmra.mxu0 %v631
    %v701 = vpop.f32.mrf.mxu0
    %v702 = vadd.f32 0.0, %v701
    %v703 = vpop.f32.mrf.mxu0
    %704 = vdwg.mxu0
    %v705 = vadd.f32 %v634, %v702
    %v706 = vtanh.pop %v705
    %707 = vst [vmem:[%s633] sm:$0xff] %v706
    %s708 = scalar_lea.vmem [#allocation3], 56
    %v709 = vld [vmem:[%s708] sm:$0xff]
    %710 = vmatprep.subr.mxu0 0.0
    %711 = vmatpush1.msra.mxu0 %v182
    %712 = vmatprep.subr.mxu0 0.0
    %713 = vmatpush1.msra.mxu0 %v181
    %714 = vmatprep.subr.mxu0 0.0
    %715 = vmatpush1.msra.mxu0 %v180
    %716 = vmatprep.subr.mxu0 0.0
    %717 = vmatpush1.msra.mxu0 %v179
    %718 = vmatprep.subr.mxu0 0.0
    %719 = vmatpush1.msra.mxu0 %v178
    %720 = vmatprep.subr.mxu0 0.0
    %721 = vmatpush1.msra.mxu0 %v177
    %722 = vmatprep.subr.mxu0 0.0
    %723 = vmatpush1.msra.mxu0 %v176
    %724 = vmatprep.subr.mxu0 0.0
    %725 = vmatpush1.msra.mxu0 %v175
    %726 = vmatprep.subr.mxu0 0.0
    %727 = vmatpush1.msra.mxu0 %v174
    %728 = vmatprep.subr.mxu0 0.0
    %729 = vmatpush1.msra.mxu0 %v173
    %730 = vmatprep.subr.mxu0 0.0
    %731 = vmatpush1.msra.mxu0 %v172
    %732 = vmatprep.subr.mxu0 0.0
    %733 = vmatpush1.msra.mxu0 %v171
    %734 = vmatprep.subr.mxu0 0.0
    %735 = vmatpush1.msra.mxu0 %v170
    %736 = vmatprep.subr.mxu0 0.0
    %737 = vmatpush1.msra.mxu0 %v169
    %738 = vmatprep.subr.mxu0 0.0
    %739 = vmatpush1.msra.mxu0 %v168
    %740 = vmatprep.subr.mxu0 0.0
    %741 = vmatpush1.msra.mxu0 %v167
    %742 = vmatprep.subr.mxu0 0.0
    %743 = vmatpush2.msra.mxu0 0.0
    %744 = vmatprep.subr.mxu0 0.0
    %745 = vmatpush2.msra.mxu0 0.0
    %746 = vmatprep.subr.mxu0 0.0
    %747 = vmatpush2.msra.mxu0 0.0
    %748 = vmatprep.subr.mxu0 0.0
    %749 = vmatpush2.msra.mxu0 0.0
    %750 = vmatprep.subr.mxu0 0.0
    %751 = vmatpush2.msra.mxu0 0.0
    %752 = vmatprep.subr.mxu0 0.0
    %753 = vmatpush2.msra.mxu0 0.0
    %754 = vmatprep.subr.mxu0 0.0
    %755 = vmatpush2.msra.mxu0 0.0
    %756 = vmatprep.subr.mxu0 0.0
    %757 = vmatpush2.msra.mxu0 0.0
    %758 = vmatprep.subr.mxu0 0.0
    %759 = vmatpush2.msra.mxu0 0.0
    %760 = vmatprep.subr.mxu0 0.0
    %761 = vmatpush2.msra.mxu0 0.0
    %762 = vmatprep.subr.mxu0 0.0
    %763 = vmatpush2.msra.mxu0 0.0
    %764 = vmatprep.subr.mxu0 0.0
    %765 = vmatpush2.msra.mxu0 0.0
    %766 = vmatprep.subr.mxu0 0.0
    %767 = vmatpush2.msra.mxu0 0.0
    %768 = vmatprep.subr.mxu0 0.0
    %769 = vmatpush2.msra.mxu0 0.0
    %770 = vmatprep.subr.mxu0 0.0
    %771 = vmatpush2.msra.mxu0 0.0
    %772 = vmatprep.subr.mxu0 0.0
    %773 = vmatpush2.msra.mxu0 0.0
    %774 = vmatprep.mubr.f32.mxu0 0.0
    %775 = vmatmul.mubr.f32.gmra.mxu0 %v706
    %v776 = vpop.f32.mrf.mxu0
    %v777 = vadd.f32 0.0, %v776
    %v778 = vpop.f32.mrf.mxu0
    %779 = vdwg.mxu0
    %v780 = vadd.f32 %v709, %v777
    %v781 = vtanh.pop %v780
    %782 = vst [vmem:[%s708] sm:$0xff] %v781
    %783 = vst [vmem:[#allocation2] sm:$0xff] %v781
    %v784 = vld [vmem:[#allocation3] sm:$0xff]
    %v785 = vld [vmem:[#allocation3 + $0x8] sm:$0xff]
    %v786 = vld [vmem:[#allocation3 + $0x10] sm:$0xff]
    %v787 = vld [vmem:[#allocation3 + $0x18] sm:$0xff]
    %v788 = vld [vmem:[#allocation3 + $0x20] sm:$0xff]
    %v789 = vld [vmem:[#allocation3 + $0x28] sm:$0xff]
    %v790 = vld [vmem:[#allocation3 + $0x30] sm:$0xff]
    %v791 = vld [vmem:[#allocation3 + $0x38] sm:$0xff]
    %v792 = vpack.c.bf16 %v785, %v784
    %v793 = vpack.c.bf16 %v787, %v786
    %v794 = vpack.c.bf16 %v789, %v788
    %v795 = vpack.c.bf16 %v791, %v790
    %v796 = vld [vmem:[%s4] sm:$0xf]
    %v797 = vld [vmem:[%s4 + $0x4] sm:$0xf]
    %v798 = vld [vmem:[%s4 + $0x8] sm:$0xf]
    %v799 = vld [vmem:[%s4 + $0xc] sm:$0xf]
    %v800 = vld [vmem:[%s4 + $0x10] sm:$0xf]
    %v801 = vld [vmem:[%s4 + $0x14] sm:$0xf]
    %v802 = vld [vmem:[%s4 + $0x18] sm:$0xf]
    %v803 = vld [vmem:[%s4 + $0x1c] sm:$0xf]
    %v804 = vld [vmem:[%s4 + $0x20] sm:$0xf]
    %v805 = vld [vmem:[%s4 + $0x24] sm:$0xf]
    %v806 = vld [vmem:[%s4 + $0x28] sm:$0xf]
    %v807 = vld [vmem:[%s4 + $0x2c] sm:$0xf]
    %v808 = vld [vmem:[%s4 + $0x30] sm:$0xf]
    %v809 = vld [vmem:[%s4 + $0x34] sm:$0xf]
    %v810 = vld [vmem:[%s4 + $0x38] sm:$0xf]
    %v811 = vld [vmem:[%s4 + $0x3c] sm:$0xf]
    %v812 = vld [vmem:[%s5] sm:$0x1]
    %v814 = vlaneseq
    %v815 = vshrl.u32 %v814, 7
    %v816 = vsub.s32 0, %v815
    %v817 = vrot.slane %v812, %v816
    %v835 = vunpack.c.l.b16 %v796
    %v836 = vunpack.c.l.b16 %v797
    %v837 = vunpack.c.l.b16 %v798
    %v838 = vunpack.c.l.b16 %v799
    %v839 = vunpack.c.l.b16 %v800
    %v840 = vunpack.c.l.b16 %v801
    %v841 = vunpack.c.l.b16 %v802
    %v842 = vunpack.c.l.b16 %v803
    %v843 = vunpack.c.l.b16 %v804
    %v844 = vunpack.c.l.b16 %v805
    %v845 = vunpack.c.l.b16 %v806
    %v846 = vunpack.c.l.b16 %v807
    %v847 = vunpack.c.l.b16 %v808
    %v848 = vunpack.c.l.b16 %v809
    %v849 = vunpack.c.l.b16 %v810
    %v850 = vunpack.c.l.b16 %v811
    %v851 = vpack.c.b16 %v836, %v835
    %v852 = vpack.c.b16 %v838, %v837
    %v853 = vpack.c.b16 %v840, %v839
    %v854 = vpack.c.b16 %v842, %v841
    %v855 = vpack.c.b16 %v844, %v843
    %v856 = vpack.c.b16 %v846, %v845
    %v857 = vpack.c.b16 %v848, %v847
    %v858 = vpack.c.b16 %v850, %v849
    %867 = vmatprep.subr.bf16.mxu0 0
    %868 = vmatpush1.bf16.msra.mxu0 %v858
    %869 = vmatprep.subr.bf16.mxu0 0
    %870 = vmatpush1.bf16.msra.mxu0 %v857
    %871 = vmatprep.subr.bf16.mxu0 0
    %872 = vmatpush1.bf16.msra.mxu0 %v856
    %873 = vmatprep.subr.bf16.mxu0 0
    %874 = vmatpush1.bf16.msra.mxu0 %v855
    %875 = vmatprep.subr.bf16.mxu0 0
    %876 = vmatpush1.bf16.msra.mxu0 %v854
    %877 = vmatprep.subr.bf16.mxu0 0
    %878 = vmatpush1.bf16.msra.mxu0 %v853
    %879 = vmatprep.subr.bf16.mxu0 0
    %880 = vmatpush1.bf16.msra.mxu0 %v852
    %881 = vmatprep.subr.bf16.mxu0 0
    %882 = vmatpush1.bf16.msra.mxu0 %v851
    %883 = vmatprep.subr.bf16.mxu0 0
    %884 = vmatpush2.bf16.msra.mxu0 0
    %885 = vmatprep.subr.bf16.mxu0 0
    %886 = vmatpush2.bf16.msra.mxu0 0
    %887 = vmatprep.subr.bf16.mxu0 0
    %888 = vmatpush2.bf16.msra.mxu0 0
    %889 = vmatprep.subr.bf16.mxu0 0
    %890 = vmatpush2.bf16.msra.mxu0 0
    %891 = vmatprep.subr.bf16.mxu0 0
    %892 = vmatpush2.bf16.msra.mxu0 0
    %893 = vmatprep.subr.bf16.mxu0 0
    %894 = vmatpush2.bf16.msra.mxu0 0
    %895 = vmatprep.subr.bf16.mxu0 0
    %896 = vmatpush2.bf16.msra.mxu0 0
    %897 = vmatprep.subr.bf16.mxu0 0
    %898 = vmatpush2.bf16.msra.mxu0 0
    %899 = vmatprep.mubr.bf16.mxu0 0
    %900 = vmatmul.mubr.bf16.gmra.mxu0 %v792
    %v901 = vpop.f32.mrf.mxu0
    %v902 = vadd.f32 %v817, %v901
    %v903 = vpop.f32.mrf.mxu0
    %v904 = vpop.f32.mrf.mxu0
    %v905 = vadd.f32 %v817, %v904
    %v906 = vpop.f32.mrf.mxu0
    %907 = vmatprep.mubr.bf16.mxu0 0
    %908 = vmatmul.mubr.bf16.gmra.mxu0 %v793
    %v909 = vpop.f32.mrf.mxu0
    %v910 = vadd.f32 %v817, %v909
    %v911 = vpop.f32.mrf.mxu0
    %v912 = vpop.f32.mrf.mxu0
    %v913 = vadd.f32 %v817, %v912
    %v914 = vpop.f32.mrf.mxu0
    %915 = vmatprep.mubr.bf16.mxu0 0
    %916 = vmatmul.mubr.bf16.gmra.mxu0 %v794
    %v917 = vpop.f32.mrf.mxu0
    %v918 = vadd.f32 %v817, %v917
    %v919 = vpop.f32.mrf.mxu0
    %v920 = vpop.f32.mrf.mxu0
    %v921 = vadd.f32 %v817, %v920
    %v922 = vpop.f32.mrf.mxu0
    %923 = vmatprep.mubr.bf16.mxu0 0
    %924 = vmatmul.mubr.bf16.gmra.mxu0 %v795
    %v925 = vpop.f32.mrf.mxu0
    %v926 = vadd.f32 %v817, %v925
    %v927 = vpop.f32.mrf.mxu0
    %v928 = vpop.f32.mrf.mxu0
    %v929 = vadd.f32 %v817, %v928
    %v930 = vpop.f32.mrf.mxu0
    %931 = vdwg.mxu0
    %932 = vst [vmem:[#allocation4] sm:$0xff] %v902
    %933 = vst [vmem:[#allocation4 + $0x8] sm:$0xff] %v905
    %934 = vst [vmem:[#allocation4 + $0x10] sm:$0xff] %v910
    %935 = vst [vmem:[#allocation4 + $0x18] sm:$0xff] %v913
    %936 = vst [vmem:[#allocation4 + $0x20] sm:$0xff] %v918
    %937 = vst [vmem:[#allocation4 + $0x28] sm:$0xff] %v921
    %938 = vst [vmem:[#allocation4 + $0x30] sm:$0xff] %v926
    %939 = vst [vmem:[#allocation4 + $0x38] sm:$0xff] %v929
    // Predicated region
    $region30: #{_rnn_forward_impl.1} parent=1 // pred_check
      _
    $region31: #{_rnn_forward_impl.1} parent=1 // pred_check_branch
      %941 = sbr.rel (0) target = $region33
    $region32: #{_rnn_forward_impl.1} parent=1 // pred_region
      %s943 = ssub.s32 1024, 1024
      %944 = vsyncadd [#allocation5], %s943
      %s945 = sshll.u32 [#allocation4], 4
      %s946 = int_to_ptr.vmem [resolvable:$true] %s945
      %951 = dma.vmem_to_hbm [thread:$0]  %s946, 1024, %s6, [#allocation5], 128, 128, 8
    $region33: #{_rnn_forward_impl.1} parent=1 // pred_fallthru
      _
    // Predicated region
    $region34: #{_rnn_forward_impl.1} parent=1 // pred_check
      _
    $region35: #{_rnn_forward_impl.1} parent=1 // pred_check_branch
      %953 = sbr.rel (0) target = $region37
    $region36: #{_rnn_forward_impl.1} parent=1 // pred_region
      %954 = dma.done [#allocation5], 1024
    $region37: #{_rnn_forward_impl.1} parent=1 // pred_fallthru
      _
    %955 = vsyncpa [#allocation5], 1

</llo_original>
